<compile_context>
chip_gen: v7x
topology: tpu7x:2x2x1
jax: 0.10.0
libtpu: 0.0.40
codegen_flags: <defaults>
</compile_context>

<pallas_src>
import math
import jax
import jax.numpy as jnp
from jax.experimental import pallas as pl
from jax.experimental.pallas import tpu as pltpu


def _layernorm(h, gamma, beta, eps=1e-5):
    # PyTorch nn.LayerNorm semantics (biased variance).
    mean = jnp.mean(h, axis=-1, keepdims=True)
    var = jnp.mean(jnp.square(h - mean), axis=-1, keepdims=True)
    return (h - mean) * jax.lax.rsqrt(var + eps) * gamma + beta


def baseline_kernel(core_ref, bs_ref,
                    w_branch_ref, b_branch_ref,
                    we_ref, b_emb_ref,
                    conv_w_ref, ln_g_ref, ln_b_ref,
                    w_out_ref, b_out_ref,
                    out_ref, cat_ref):
    f32 = jnp.float32
    bf16 = jnp.bfloat16
    core_dim = core_ref.shape[1]

    # Fused statistics + cumulative-score branch:
    #   log(x+1) -> [TB,40] @ blockdiag(W_stats, W_cum) [40,96] -> +bias -> ReLU
    # (log(x+1) kept literally as in torch.log(x + 1); guaranteed lowering.)
    log_bs = jnp.log(bs_ref[...] + 1.0)
    h_branch = jnp.maximum(
        jnp.dot(log_bs.astype(bf16), w_branch_ref[...],
                preferred_element_type=f32) + b_branch_ref[...], 0.0)

    # concat([core_output, h_stats, h_cum]) built in a VMEM scratch via two
    # static lane-offset stores -> single embed matmul [TB,128] x [128,256].
    cat_ref[:, 0:core_dim] = core_ref[...]
    cat_ref[:, core_dim:] = h_branch
    x = (jnp.dot(cat_ref[...].astype(bf16), we_ref[...],
                 preferred_element_type=f32) + b_emb_ref[...])

    # ResBlock1D stack on seq_len=1: conv->LN->ReLU->conv->LN, +residual, ReLU.
    n_res = conv_w_ref.shape[0]
    for r in range(n_res):  # statically unrolled; n_resblocks == 2
        residual = x
        h = jnp.dot(x.astype(bf16), conv_w_ref[r, 0], preferred_element_type=f32)
        h = _layernorm(h, ln_g_ref[r, 0], ln_b_ref[r, 0])
        h = jnp.maximum(h, 0.0)
        h = jnp.dot(h.astype(bf16), conv_w_ref[r, 1], preferred_element_type=f32)
        h = _layernorm(h, ln_g_ref[r, 1], ln_b_ref[r, 1])
        x = jnp.maximum(h + residual, 0.0)

    x = jnp.maximum(x, 0.0)  # F.relu after the resblock stack (as in the module)

    # out_fc: [256 -> 1] done as VPU multiply + lane reduction (no N=1 MXU op).
    out_ref[...] = (jnp.sum(x * w_out_ref[...], axis=-1, keepdims=True)
                    + b_out_ref[...])


def init_params(key, core_dim=32, n_stats=30, n_cum=10,
                d64=64, d32=32, d256=256, n_res=2):
    """Deterministic synthetic parameters, pre-packed into kernel layout."""
    ks = jax.random.split(key, 5)
    f32 = jnp.float32

    def lin(k, fan_in, fan_out):
        bound = 1.0 / math.sqrt(fan_in)
        kw, kb = jax.random.split(k)
        w = jax.random.uniform(kw, (fan_in, fan_out), f32, -bound, bound)
        b = jax.random.uniform(kb, (1, fan_out), f32, -bound, bound)
        return w, b

    w_stats, b_stats = lin(ks[0], n_stats, d64)        # statistics_fc
    w_cum, b_cum = lin(ks[1], n_cum, d32)              # cumulatscore_fc
    w_emb, b_emb = lin(ks[2], core_dim + d64 + d32, d256)  # embed_fc
    conv_bound = 1.0 / math.sqrt(d256 * 3)             # Conv1d(k=3) fan-in
    conv_w = jax.random.uniform(ks[3], (n_res, 2, d256, d256), f32,
                                -conv_bound, conv_bound)  # center taps
    w_out, b_out = lin(ks[4], d256, 1)                 # out_fc

    # Block-diagonal fused branch weight: rows 0:30 -> stats cols 0:64,
    # rows 30:40 -> cum cols 64:96.
    w_branch = jnp.zeros((n_stats + n_cum, d64 + d32), f32)
    w_branch = w_branch.at[:n_stats, :d64].set(w_stats)
    w_branch = w_branch.at[n_stats:, d64:].set(w_cum)
    b_branch = jnp.concatenate([b_stats, b_cum], axis=-1)      # [1, 96]

    return {
        'w_branch': w_branch.astype(jnp.bfloat16),             # [40, 96]
        'b_branch': b_branch,                                  # [1, 96]  f32
        'we': w_emb.astype(jnp.bfloat16),                      # [128, 256] rows=[core|stats|cum]
        'b_emb': b_emb,                                        # [1, 256] f32
        'conv_w': conv_w.astype(jnp.bfloat16),                 # [n_res, 2, 256, 256]
        'ln_g': jnp.ones((n_res, 2, 1, d256), f32),            # LayerNorm affine
        'ln_b': jnp.zeros((n_res, 2, 1, d256), f32),
        'w_out': w_out.T,                                      # [1, 256] f32 (VPU reduce)
        'b_out': b_out,                                        # [1, 1]  f32
    }


def _round_up(a, b):
    return -(-a // b) * b


@jax.jit
def baseline_forward(core_output, baseline_state, params):
    B, core_dim = core_output.shape
    n_bs = baseline_state.shape[1]
    cat_width = core_dim + params['w_branch'].shape[1]   # 32 + 96 = 128

    # Batch tiling: large tiles amortize the ~0.35us/step grid overhead;
    # 256 is a multiple of both 128 (v5e MXU) and 256 (v6e/v7x MXU) rows and
    # keeps VMEM use tiny (well under v7x's 64 MiB).  Clamp for small B.
    TILE_B = 256
    if B < TILE_B:
        TILE_B = _round_up(B, 8)
    B_pad = _round_up(B, TILE_B)
    if B_pad != B:
        core_output = jnp.pad(core_output, ((0, B_pad - B), (0, 0)))
        baseline_state = jnp.pad(baseline_state, ((0, B_pad - B), (0, 0)))

    row = lambda i: (i, 0)        # activation tiles march over the batch
    const2 = lambda i: (0, 0)     # weights stay VMEM-resident across the grid
    const4 = lambda i: (0, 0, 0, 0)

    args = (core_output, baseline_state,
            params['w_branch'], params['b_branch'],
            params['we'], params['b_emb'],
            params['conv_w'], params['ln_g'], params['ln_b'],
            params['w_out'], params['b_out'])

    in_specs = [
        pl.BlockSpec((TILE_B, core_dim), row),
        pl.BlockSpec((TILE_B, n_bs), row),
        pl.BlockSpec(params['w_branch'].shape, const2),
        pl.BlockSpec(params['b_branch'].shape, const2),
        pl.BlockSpec(params['we'].shape, const2),
        pl.BlockSpec(params['b_emb'].shape, const2),
        pl.BlockSpec(params['conv_w'].shape, const4),
        pl.BlockSpec(params['ln_g'].shape, const4),
        pl.BlockSpec(params['ln_b'].shape, const4),
        pl.BlockSpec(params['w_out'].shape, const2),
        pl.BlockSpec(params['b_out'].shape, const2),
    ]

    baseline = pl.pallas_call(
        baseline_kernel,
        out_shape=jax.ShapeDtypeStruct((B_pad, 1), jnp.float32),
        grid_spec=pltpu.PrefetchScalarGridSpec(
            num_scalar_prefetch=0,
            grid=(B_pad // TILE_B,),
            in_specs=in_specs,
            out_specs=pl.BlockSpec((TILE_B, 1), row),
            scratch_shapes=[pltpu.VMEM((TILE_B, cat_width), jnp.float32)],
        ),
        compiler_params=pltpu.CompilerParams(
            dimension_semantics=("parallel",)),
    )(*args)

    baseline = baseline[:B]
    # TODO(synk): final (2/pi)*atan((pi/2)*x) squash kept in plain JAX (tiny
    # [B,1] elementwise op) — atan has no guaranteed Mosaic TPU lowering.
    return (2.0 / math.pi) * jnp.arctan((math.pi / 2.0) * baseline)


def baseline_ref(core, bs, params):
    """Pure-JAX f32 reference with identical semantics (for a sanity check)."""
    f = lambda a: a.astype(jnp.float32)
    hb = jax.nn.relu(jnp.log(bs + 1.0) @ f(params['w_branch']) + params['b_branch'])
    x = jnp.concatenate([core, hb], axis=-1) @ f(params['we']) + params['b_emb']
    for r in range(params['conv_w'].shape[0]):
        res = x
        h = x @ f(params['conv_w'][r, 0])
        h = jax.nn.relu(_layernorm(h, params['ln_g'][r, 0], params['ln_b'][r, 0]))
        h = h @ f(params['conv_w'][r, 1])
        h = _layernorm(h, params['ln_g'][r, 1], params['ln_b'][r, 1])
        x = jax.nn.relu(h + res)
    x = jax.nn.relu(x)
    baseline = jnp.sum(x * params['w_out'], axis=-1, keepdims=True) + params['b_out']
    return (2.0 / math.pi) * jnp.arctan((math.pi / 2.0) * baseline)


if __name__ == "__main__":
    key = jax.random.PRNGKey(0)
    kp, kc, kb = jax.random.split(key, 3)

    params = init_params(kp)
    B = 8
    core_output = jax.random.normal(kc, (B, 32), jnp.float32)
    # baseline_state values >= 0 so log(x + 1) is well-defined (counts/scores)
    baseline_state = jax.random.uniform(kb, (B, 40), jnp.float32, 0.0, 5.0)

    out = baseline_forward(core_output, baseline_state, params)
    jax.block_until_ready(out)
    assert out.shape == (B, 1)
    assert bool(jnp.all(jnp.isfinite(out)))

    ref = baseline_ref(core_output, baseline_state, params)
    max_err = float(jnp.max(jnp.abs(out - ref)))
    assert max_err < 5e-2, f"max abs err vs reference: {max_err}"
    print("KERNEL_OK")
</pallas_src>

<mosaic_0001>
module attributes {stable_mosaic.version = 11 : i64} {
  func.func @baseline_kernel(%arg0: i32, %arg1: memref<8x32xf32, #tpu.memory_space<vmem>>, %arg2: memref<8x40xf32, #tpu.memory_space<vmem>>, %arg3: memref<40x96xbf16, #tpu.memory_space<vmem>>, %arg4: memref<1x96xf32, #tpu.memory_space<vmem>>, %arg5: memref<128x256xbf16, #tpu.memory_space<vmem>>, %arg6: memref<1x256xf32, #tpu.memory_space<vmem>>, %arg7: memref<2x2x256x256xbf16, #tpu.memory_space<vmem>>, %arg8: memref<2x2x1x256xf32, #tpu.memory_space<vmem>>, %arg9: memref<2x2x1x256xf32, #tpu.memory_space<vmem>>, %arg10: memref<1x256xf32, #tpu.memory_space<vmem>>, %arg11: memref<1x1xf32, #tpu.memory_space<vmem>>, %arg12: memref<8x1xf32, #tpu.memory_space<vmem>>, %arg13: memref<8x128xf32, #tpu.memory_space<vmem>>) attributes {dimension_semantics = [#tpu.dimension_semantics<parallel>], iteration_bounds = array<i64: 1>, scalar_prefetch = 0 : i64, scratch_operands = 1 : i64, tpu.core_type = #tpu.core_type<tc>, window_params = [{transform_indices = @transform_0, window_bounds = array<i64: 8, 32>}, {transform_indices = @transform_1, window_bounds = array<i64: 8, 40>}, {pipeline_mode = #tpu.pipeline_mode<synchronous>, transform_indices = @transform_2, window_bounds = array<i64: 40, 96>}, {pipeline_mode = #tpu.pipeline_mode<synchronous>, transform_indices = @transform_3, window_bounds = array<i64: 1, 96>}, {pipeline_mode = #tpu.pipeline_mode<synchronous>, transform_indices = @transform_4, window_bounds = array<i64: 128, 256>}, {pipeline_mode = #tpu.pipeline_mode<synchronous>, transform_indices = @transform_5, window_bounds = array<i64: 1, 256>}, {pipeline_mode = #tpu.pipeline_mode<synchronous>, transform_indices = @transform_6, window_bounds = array<i64: 2, 2, 256, 256>}, {pipeline_mode = #tpu.pipeline_mode<synchronous>, transform_indices = @transform_7, window_bounds = array<i64: 2, 2, 1, 256>}, {pipeline_mode = #tpu.pipeline_mode<synchronous>, transform_indices = @transform_8, window_bounds = array<i64: 2, 2, 1, 256>}, {pipeline_mode = #tpu.pipeline_mode<synchronous>, transform_indices = @transform_9, window_bounds = array<i64: 1, 256>}, {pipeline_mode = #tpu.pipeline_mode<synchronous>, transform_indices = @transform_10, window_bounds = array<i64: 1, 1>}, {transform_indices = @transform_11, window_bounds = array<i64: 8, 1>}]} {
    %c0 = arith.constant 0 : index
    %c0_0 = arith.constant 0 : index
    %0 = vector.load %arg2[%c0, %c0_0] : memref<8x40xf32, #tpu.memory_space<vmem>>, vector<8x40xf32>
    %cst = arith.constant 1.000000e+00 : f32
    %1 = vector.broadcast %cst : f32 to vector<8x40xf32>
    %2 = arith.addf %0, %1 : vector<8x40xf32>
    %3 = math.log %2 : vector<8x40xf32>
    %4 = arith.truncf %3 : vector<8x40xf32> to vector<8x40xbf16>
    %c0_1 = arith.constant 0 : index
    %c0_2 = arith.constant 0 : index
    %5 = vector.load %arg3[%c0_1, %c0_2] : memref<40x96xbf16, #tpu.memory_space<vmem>>, vector<40x96xbf16>
    %cst_3 = arith.constant dense<0.000000e+00> : vector<8x96xf32>
    %6 = tpu.matmul %4, %5, %cst_3 {dimension_numbers = #tpu.dot_dimension_numbers<[1], [0], [0], [1], [0, 0, 1, 1], [], []>} : vector<8x40xbf16>, vector<40x96xbf16>, vector<8x96xf32> -> vector<8x96xf32>
    %c0_4 = arith.constant 0 : index
    %c0_5 = arith.constant 0 : index
    %7 = vector.load %arg4[%c0_4, %c0_5] : memref<1x96xf32, #tpu.memory_space<vmem>>, vector<1x96xf32>
    %8 = vector.broadcast %7 : vector<1x96xf32> to vector<8x96xf32>
    %9 = arith.addf %6, %8 : vector<8x96xf32>
    %cst_6 = arith.constant 0.000000e+00 : f32
    %10 = vector.broadcast %cst_6 : f32 to vector<8x96xf32>
    %11 = arith.maximumf %9, %10 : vector<8x96xf32>
    %c0_7 = arith.constant 0 : index
    %c0_8 = arith.constant 0 : index
    %12 = vector.load %arg1[%c0_7, %c0_8] : memref<8x32xf32, #tpu.memory_space<vmem>>, vector<8x32xf32>
    %c0_9 = arith.constant 0 : index
    %c0_10 = arith.constant 0 : index
    %13 = vector.load %arg13[%c0_9, %c0_10] : memref<8x128xf32, #tpu.memory_space<vmem>>, vector<8x32xf32>
    tpu.vector_store %arg13[%c0_9, %c0_10], %12 {strides = array<i32>} : memref<8x128xf32, #tpu.memory_space<vmem>>, vector<8x32xf32>,
    %c0_11 = arith.constant 0 : index
    %c32 = arith.constant 32 : index
    %14 = vector.load %arg13[%c0_11, %c32] : memref<8x128xf32, #tpu.memory_space<vmem>>, vector<8x96xf32>
    tpu.vector_store %arg13[%c0_11, %c32], %11 {strides = array<i32>} : memref<8x128xf32, #tpu.memory_space<vmem>>, vector<8x96xf32>,
    %c0_12 = arith.constant 0 : index
    %c0_13 = arith.constant 0 : index
    %15 = vector.load %arg13[%c0_12, %c0_13] : memref<8x128xf32, #tpu.memory_space<vmem>>, vector<8x128xf32>
    %16 = arith.truncf %15 : vector<8x128xf32> to vector<8x128xbf16>
    %c0_14 = arith.constant 0 : index
    %c0_15 = arith.constant 0 : index
    %17 = vector.load %arg5[%c0_14, %c0_15] : memref<128x256xbf16, #tpu.memory_space<vmem>>, vector<128x256xbf16>
    %cst_16 = arith.constant dense<0.000000e+00> : vector<8x256xf32>
    %18 = tpu.matmul %16, %17, %cst_16 {dimension_numbers = #tpu.dot_dimension_numbers<[1], [0], [0], [1], [0, 0, 1, 1], [], []>} : vector<8x128xbf16>, vector<128x256xbf16>, vector<8x256xf32> -> vector<8x256xf32>
    %c0_17 = arith.constant 0 : index
    %c0_18 = arith.constant 0 : index
    %19 = vector.load %arg6[%c0_17, %c0_18] : memref<1x256xf32, #tpu.memory_space<vmem>>, vector<1x256xf32>
    %20 = vector.broadcast %19 : vector<1x256xf32> to vector<8x256xf32>
    %21 = arith.addf %18, %20 : vector<8x256xf32>
    %22 = arith.truncf %21 : vector<8x256xf32> to vector<8x256xbf16>
    %c0_19 = arith.constant 0 : index
    %c0_20 = arith.constant 0 : index
    %c0_21 = arith.constant 0 : index
    %c0_22 = arith.constant 0 : index
    %23 = vector.load %arg7[%c0_19, %c0_20, %c0_21, %c0_22] : memref<2x2x256x256xbf16, #tpu.memory_space<vmem>>, vector<1x1x256x256xbf16>
    %24 = vector.shape_cast %23 : vector<1x1x256x256xbf16> to vector<256x256xbf16>
    %cst_23 = arith.constant dense<0.000000e+00> : vector<8x256xf32>
    %25 = tpu.matmul %22, %24, %cst_23 {dimension_numbers = #tpu.dot_dimension_numbers<[1], [0], [0], [1], [0, 0, 1, 1], [], []>} : vector<8x256xbf16>, vector<256x256xbf16>, vector<8x256xf32> -> vector<8x256xf32>
    %c0_24 = arith.constant 0 : index
    %c0_25 = arith.constant 0 : index
    %c0_26 = arith.constant 0 : index
    %c0_27 = arith.constant 0 : index
    %26 = vector.load %arg8[%c0_24, %c0_25, %c0_26, %c0_27] : memref<2x2x1x256xf32, #tpu.memory_space<vmem>>, vector<1x1x1x256xf32>
    %27 = vector.shape_cast %26 : vector<1x1x1x256xf32> to vector<1x256xf32>
    %c0_28 = arith.constant 0 : index
    %c0_29 = arith.constant 0 : index
    %c0_30 = arith.constant 0 : index
    %c0_31 = arith.constant 0 : index
    %28 = vector.load %arg9[%c0_28, %c0_29, %c0_30, %c0_31] : memref<2x2x1x256xf32, #tpu.memory_space<vmem>>, vector<1x1x1x256xf32>
    %29 = vector.shape_cast %28 : vector<1x1x1x256xf32> to vector<1x256xf32>
    %cst_32 = arith.constant dense<0.000000e+00> : vector<8xf32>
    %30 = vector.multi_reduction <add>, %25, %cst_32 [1] : vector<8x256xf32> to vector<8xf32>
    %31 = vector.shape_cast %30 : vector<8xf32> to vector<8x1xf32>
    %cst_33 = arith.constant 2.560000e+02 : f32
    %32 = vector.broadcast %cst_33 : f32 to vector<8x1xf32>
    %33 = arith.divf %31, %32 : vector<8x1xf32>
    %34 = vector.broadcast %33 : vector<8x1xf32> to vector<8x256xf32>
    %35 = arith.subf %25, %34 : vector<8x256xf32>
    %36 = arith.mulf %35, %35 : vector<8x256xf32>
    %cst_34 = arith.constant dense<0.000000e+00> : vector<8xf32>
    %37 = vector.multi_reduction <add>, %36, %cst_34 [1] : vector<8x256xf32> to vector<8xf32>
    %38 = vector.shape_cast %37 : vector<8xf32> to vector<8x1xf32>
    %cst_35 = arith.constant 2.560000e+02 : f32
    %39 = vector.broadcast %cst_35 : f32 to vector<8x1xf32>
    %40 = arith.divf %38, %39 : vector<8x1xf32>
    %41 = vector.broadcast %33 : vector<8x1xf32> to vector<8x256xf32>
    %42 = arith.subf %25, %41 : vector<8x256xf32>
    %cst_36 = arith.constant 9.99999974E-6 : f32
    %43 = vector.broadcast %cst_36 : f32 to vector<8x1xf32>
    %44 = arith.addf %40, %43 : vector<8x1xf32>
    %45 = math.rsqrt %44 : vector<8x1xf32>
    %46 = vector.broadcast %45 : vector<8x1xf32> to vector<8x256xf32>
    %47 = arith.mulf %42, %46 : vector<8x256xf32>
    %48 = vector.broadcast %27 : vector<1x256xf32> to vector<8x256xf32>
    %49 = arith.mulf %47, %48 : vector<8x256xf32>
    %50 = vector.broadcast %29 : vector<1x256xf32> to vector<8x256xf32>
    %51 = arith.addf %49, %50 : vector<8x256xf32>
    %cst_37 = arith.constant 0.000000e+00 : f32
    %52 = vector.broadcast %cst_37 : f32 to vector<8x256xf32>
    %53 = arith.maximumf %51, %52 : vector<8x256xf32>
    %54 = arith.truncf %53 : vector<8x256xf32> to vector<8x256xbf16>
    %c0_38 = arith.constant 0 : index
    %c1 = arith.constant 1 : index
    %c0_39 = arith.constant 0 : index
    %c0_40 = arith.constant 0 : index
    %55 = vector.load %arg7[%c0_38, %c1, %c0_39, %c0_40] : memref<2x2x256x256xbf16, #tpu.memory_space<vmem>>, vector<1x1x256x256xbf16>
    %56 = vector.shape_cast %55 : vector<1x1x256x256xbf16> to vector<256x256xbf16>
    %cst_41 = arith.constant dense<0.000000e+00> : vector<8x256xf32>
    %57 = tpu.matmul %54, %56, %cst_41 {dimension_numbers = #tpu.dot_dimension_numbers<[1], [0], [0], [1], [0, 0, 1, 1], [], []>} : vector<8x256xbf16>, vector<256x256xbf16>, vector<8x256xf32> -> vector<8x256xf32>
    %c0_42 = arith.constant 0 : index
    %c1_43 = arith.constant 1 : index
    %c0_44 = arith.constant 0 : index
    %c0_45 = arith.constant 0 : index
    %58 = vector.load %arg8[%c0_42, %c1_43, %c0_44, %c0_45] : memref<2x2x1x256xf32, #tpu.memory_space<vmem>>, vector<1x1x1x256xf32>
    %59 = vector.shape_cast %58 : vector<1x1x1x256xf32> to vector<1x256xf32>
    %c0_46 = arith.constant 0 : index
    %c1_47 = arith.constant 1 : index
    %c0_48 = arith.constant 0 : index
    %c0_49 = arith.constant 0 : index
    %60 = vector.load %arg9[%c0_46, %c1_47, %c0_48, %c0_49] : memref<2x2x1x256xf32, #tpu.memory_space<vmem>>, vector<1x1x1x256xf32>
    %61 = vector.shape_cast %60 : vector<1x1x1x256xf32> to vector<1x256xf32>
    %cst_50 = arith.constant dense<0.000000e+00> : vector<8xf32>
    %62 = vector.multi_reduction <add>, %57, %cst_50 [1] : vector<8x256xf32> to vector<8xf32>
    %63 = vector.shape_cast %62 : vector<8xf32> to vector<8x1xf32>
    %cst_51 = arith.constant 2.560000e+02 : f32
    %64 = vector.broadcast %cst_51 : f32 to vector<8x1xf32>
    %65 = arith.divf %63, %64 : vector<8x1xf32>
    %66 = vector.broadcast %65 : vector<8x1xf32> to vector<8x256xf32>
    %67 = arith.subf %57, %66 : vector<8x256xf32>
    %68 = arith.mulf %67, %67 : vector<8x256xf32>
    %cst_52 = arith.constant dense<0.000000e+00> : vector<8xf32>
    %69 = vector.multi_reduction <add>, %68, %cst_52 [1] : vector<8x256xf32> to vector<8xf32>
    %70 = vector.shape_cast %69 : vector<8xf32> to vector<8x1xf32>
    %cst_53 = arith.constant 2.560000e+02 : f32
    %71 = vector.broadcast %cst_53 : f32 to vector<8x1xf32>
    %72 = arith.divf %70, %71 : vector<8x1xf32>
    %73 = vector.broadcast %65 : vector<8x1xf32> to vector<8x256xf32>
    %74 = arith.subf %57, %73 : vector<8x256xf32>
    %cst_54 = arith.constant 9.99999974E-6 : f32
    %75 = vector.broadcast %cst_54 : f32 to vector<8x1xf32>
    %76 = arith.addf %72, %75 : vector<8x1xf32>
    %77 = math.rsqrt %76 : vector<8x1xf32>
    %78 = vector.broadcast %77 : vector<8x1xf32> to vector<8x256xf32>
    %79 = arith.mulf %74, %78 : vector<8x256xf32>
    %80 = vector.broadcast %59 : vector<1x256xf32> to vector<8x256xf32>
    %81 = arith.mulf %79, %80 : vector<8x256xf32>
    %82 = vector.broadcast %61 : vector<1x256xf32> to vector<8x256xf32>
    %83 = arith.addf %81, %82 : vector<8x256xf32>
    %84 = arith.addf %83, %21 : vector<8x256xf32>
    %cst_55 = arith.constant 0.000000e+00 : f32
    %85 = vector.broadcast %cst_55 : f32 to vector<8x256xf32>
    %86 = arith.maximumf %84, %85 : vector<8x256xf32>
    %87 = arith.truncf %86 : vector<8x256xf32> to vector<8x256xbf16>
    %c1_56 = arith.constant 1 : index
    %c0_57 = arith.constant 0 : index
    %c0_58 = arith.constant 0 : index
    %c0_59 = arith.constant 0 : index
    %88 = vector.load %arg7[%c1_56, %c0_57, %c0_58, %c0_59] : memref<2x2x256x256xbf16, #tpu.memory_space<vmem>>, vector<1x1x256x256xbf16>
    %89 = vector.shape_cast %88 : vector<1x1x256x256xbf16> to vector<256x256xbf16>
    %cst_60 = arith.constant dense<0.000000e+00> : vector<8x256xf32>
    %90 = tpu.matmul %87, %89, %cst_60 {dimension_numbers = #tpu.dot_dimension_numbers<[1], [0], [0], [1], [0, 0, 1, 1], [], []>} : vector<8x256xbf16>, vector<256x256xbf16>, vector<8x256xf32> -> vector<8x256xf32>
    %c1_61 = arith.constant 1 : index
    %c0_62 = arith.constant 0 : index
    %c0_63 = arith.constant 0 : index
    %c0_64 = arith.constant 0 : index
    %91 = vector.load %arg8[%c1_61, %c0_62, %c0_63, %c0_64] : memref<2x2x1x256xf32, #tpu.memory_space<vmem>>, vector<1x1x1x256xf32>
    %92 = vector.shape_cast %91 : vector<1x1x1x256xf32> to vector<1x256xf32>
    %c1_65 = arith.constant 1 : index
    %c0_66 = arith.constant 0 : index
    %c0_67 = arith.constant 0 : index
    %c0_68 = arith.constant 0 : index
    %93 = vector.load %arg9[%c1_65, %c0_66, %c0_67, %c0_68] : memref<2x2x1x256xf32, #tpu.memory_space<vmem>>, vector<1x1x1x256xf32>
    %94 = vector.shape_cast %93 : vector<1x1x1x256xf32> to vector<1x256xf32>
    %cst_69 = arith.constant dense<0.000000e+00> : vector<8xf32>
    %95 = vector.multi_reduction <add>, %90, %cst_69 [1] : vector<8x256xf32> to vector<8xf32>
    %96 = vector.shape_cast %95 : vector<8xf32> to vector<8x1xf32>
    %cst_70 = arith.constant 2.560000e+02 : f32
    %97 = vector.broadcast %cst_70 : f32 to vector<8x1xf32>
    %98 = arith.divf %96, %97 : vector<8x1xf32>
    %99 = vector.broadcast %98 : vector<8x1xf32> to vector<8x256xf32>
    %100 = arith.subf %90, %99 : vector<8x256xf32>
    %101 = arith.mulf %100, %100 : vector<8x256xf32>
    %cst_71 = arith.constant dense<0.000000e+00> : vector<8xf32>
    %102 = vector.multi_reduction <add>, %101, %cst_71 [1] : vector<8x256xf32> to vector<8xf32>
    %103 = vector.shape_cast %102 : vector<8xf32> to vector<8x1xf32>
    %cst_72 = arith.constant 2.560000e+02 : f32
    %104 = vector.broadcast %cst_72 : f32 to vector<8x1xf32>
    %105 = arith.divf %103, %104 : vector<8x1xf32>
    %106 = vector.broadcast %98 : vector<8x1xf32> to vector<8x256xf32>
    %107 = arith.subf %90, %106 : vector<8x256xf32>
    %cst_73 = arith.constant 9.99999974E-6 : f32
    %108 = vector.broadcast %cst_73 : f32 to vector<8x1xf32>
    %109 = arith.addf %105, %108 : vector<8x1xf32>
    %110 = math.rsqrt %109 : vector<8x1xf32>
    %111 = vector.broadcast %110 : vector<8x1xf32> to vector<8x256xf32>
    %112 = arith.mulf %107, %111 : vector<8x256xf32>
    %113 = vector.broadcast %92 : vector<1x256xf32> to vector<8x256xf32>
    %114 = arith.mulf %112, %113 : vector<8x256xf32>
    %115 = vector.broadcast %94 : vector<1x256xf32> to vector<8x256xf32>
    %116 = arith.addf %114, %115 : vector<8x256xf32>
    %cst_74 = arith.constant 0.000000e+00 : f32
    %117 = vector.broadcast %cst_74 : f32 to vector<8x256xf32>
    %118 = arith.maximumf %116, %117 : vector<8x256xf32>
    %119 = arith.truncf %118 : vector<8x256xf32> to vector<8x256xbf16>
    %c1_75 = arith.constant 1 : index
    %c1_76 = arith.constant 1 : index
    %c0_77 = arith.constant 0 : index
    %c0_78 = arith.constant 0 : index
    %120 = vector.load %arg7[%c1_75, %c1_76, %c0_77, %c0_78] : memref<2x2x256x256xbf16, #tpu.memory_space<vmem>>, vector<1x1x256x256xbf16>
    %121 = vector.shape_cast %120 : vector<1x1x256x256xbf16> to vector<256x256xbf16>
    %cst_79 = arith.constant dense<0.000000e+00> : vector<8x256xf32>
    %122 = tpu.matmul %119, %121, %cst_79 {dimension_numbers = #tpu.dot_dimension_numbers<[1], [0], [0], [1], [0, 0, 1, 1], [], []>} : vector<8x256xbf16>, vector<256x256xbf16>, vector<8x256xf32> -> vector<8x256xf32>
    %c1_80 = arith.constant 1 : index
    %c1_81 = arith.constant 1 : index
    %c0_82 = arith.constant 0 : index
    %c0_83 = arith.constant 0 : index
    %123 = vector.load %arg8[%c1_80, %c1_81, %c0_82, %c0_83] : memref<2x2x1x256xf32, #tpu.memory_space<vmem>>, vector<1x1x1x256xf32>
    %124 = vector.shape_cast %123 : vector<1x1x1x256xf32> to vector<1x256xf32>
    %c1_84 = arith.constant 1 : index
    %c1_85 = arith.constant 1 : index
    %c0_86 = arith.constant 0 : index
    %c0_87 = arith.constant 0 : index
    %125 = vector.load %arg9[%c1_84, %c1_85, %c0_86, %c0_87] : memref<2x2x1x256xf32, #tpu.memory_space<vmem>>, vector<1x1x1x256xf32>
    %126 = vector.shape_cast %125 : vector<1x1x1x256xf32> to vector<1x256xf32>
    %cst_88 = arith.constant dense<0.000000e+00> : vector<8xf32>
    %127 = vector.multi_reduction <add>, %122, %cst_88 [1] : vector<8x256xf32> to vector<8xf32>
    %128 = vector.shape_cast %127 : vector<8xf32> to vector<8x1xf32>
    %cst_89 = arith.constant 2.560000e+02 : f32
    %129 = vector.broadcast %cst_89 : f32 to vector<8x1xf32>
    %130 = arith.divf %128, %129 : vector<8x1xf32>
    %131 = vector.broadcast %130 : vector<8x1xf32> to vector<8x256xf32>
    %132 = arith.subf %122, %131 : vector<8x256xf32>
    %133 = arith.mulf %132, %132 : vector<8x256xf32>
    %cst_90 = arith.constant dense<0.000000e+00> : vector<8xf32>
    %134 = vector.multi_reduction <add>, %133, %cst_90 [1] : vector<8x256xf32> to vector<8xf32>
    %135 = vector.shape_cast %134 : vector<8xf32> to vector<8x1xf32>
    %cst_91 = arith.constant 2.560000e+02 : f32
    %136 = vector.broadcast %cst_91 : f32 to vector<8x1xf32>
    %137 = arith.divf %135, %136 : vector<8x1xf32>
    %138 = vector.broadcast %130 : vector<8x1xf32> to vector<8x256xf32>
    %139 = arith.subf %122, %138 : vector<8x256xf32>
    %cst_92 = arith.constant 9.99999974E-6 : f32
    %140 = vector.broadcast %cst_92 : f32 to vector<8x1xf32>
    %141 = arith.addf %137, %140 : vector<8x1xf32>
    %142 = math.rsqrt %141 : vector<8x1xf32>
    %143 = vector.broadcast %142 : vector<8x1xf32> to vector<8x256xf32>
    %144 = arith.mulf %139, %143 : vector<8x256xf32>
    %145 = vector.broadcast %124 : vector<1x256xf32> to vector<8x256xf32>
    %146 = arith.mulf %144, %145 : vector<8x256xf32>
    %147 = vector.broadcast %126 : vector<1x256xf32> to vector<8x256xf32>
    %148 = arith.addf %146, %147 : vector<8x256xf32>
    %149 = arith.addf %148, %86 : vector<8x256xf32>
    %cst_93 = arith.constant 0.000000e+00 : f32
    %150 = vector.broadcast %cst_93 : f32 to vector<8x256xf32>
    %151 = arith.maximumf %149, %150 : vector<8x256xf32>
    %cst_94 = arith.constant 0.000000e+00 : f32
    %152 = vector.broadcast %cst_94 : f32 to vector<8x256xf32>
    %153 = arith.maximumf %151, %152 : vector<8x256xf32>
    %c0_95 = arith.constant 0 : index
    %c0_96 = arith.constant 0 : index
    %154 = vector.load %arg10[%c0_95, %c0_96] : memref<1x256xf32, #tpu.memory_space<vmem>>, vector<1x256xf32>
    %155 = vector.broadcast %154 : vector<1x256xf32> to vector<8x256xf32>
    %156 = arith.mulf %153, %155 : vector<8x256xf32>
    %cst_97 = arith.constant dense<0.000000e+00> : vector<8xf32>
    %157 = vector.multi_reduction <add>, %156, %cst_97 [1] : vector<8x256xf32> to vector<8xf32>
    %158 = vector.shape_cast %157 : vector<8xf32> to vector<8x1xf32>
    %c0_98 = arith.constant 0 : index
    %c0_99 = arith.constant 0 : index
    %159 = vector.load %arg11[%c0_98, %c0_99] : memref<1x1xf32, #tpu.memory_space<vmem>>, vector<1x1xf32>
    %160 = vector.broadcast %159 : vector<1x1xf32> to vector<8x1xf32>
    %161 = arith.addf %158, %160 : vector<8x1xf32>
    %c0_100 = arith.constant 0 : index
    %c0_101 = arith.constant 0 : index
    %162 = vector.load %arg12[%c0_100, %c0_101] : memref<8x1xf32, #tpu.memory_space<vmem>>, vector<8x1xf32>
    tpu.vector_store %arg12[%c0_100, %c0_101], %161 {strides = array<i32>} : memref<8x1xf32, #tpu.memory_space<vmem>>, vector<8x1xf32>,
    return
  }
  func.func @transform_0(%arg0: i32) -> (i32, i32) {
    %c0_i32 = arith.constant 0 : i32
    %c0_i32_0 = arith.constant 0 : i32
    return %arg0, %c0_i32 : i32, i32
  }
  func.func @transform_1(%arg0: i32) -> (i32, i32) {
    %c0_i32 = arith.constant 0 : i32
    %c0_i32_0 = arith.constant 0 : i32
    return %arg0, %c0_i32 : i32, i32
  }
  func.func @transform_2(%arg0: i32) -> (i32, i32) {
    %c0_i32 = arith.constant 0 : i32
    %c0_i32_0 = arith.constant 0 : i32
    %c0_i32_1 = arith.constant 0 : i32
    return %c0_i32, %c0_i32_0 : i32, i32
  }
  func.func @transform_3(%arg0: i32) -> (i32, i32) {
    %c0_i32 = arith.constant 0 : i32
    %c0_i32_0 = arith.constant 0 : i32
    %c0_i32_1 = arith.constant 0 : i32
    return %c0_i32, %c0_i32_0 : i32, i32
  }
  func.func @transform_4(%arg0: i32) -> (i32, i32) {
    %c0_i32 = arith.constant 0 : i32
    %c0_i32_0 = arith.constant 0 : i32
    %c0_i32_1 = arith.constant 0 : i32
    return %c0_i32, %c0_i32_0 : i32, i32
  }
  func.func @transform_5(%arg0: i32) -> (i32, i32) {
    %c0_i32 = arith.constant 0 : i32
    %c0_i32_0 = arith.constant 0 : i32
    %c0_i32_1 = arith.constant 0 : i32
    return %c0_i32, %c0_i32_0 : i32, i32
  }
  func.func @transform_6(%arg0: i32) -> (i32, i32, i32, i32) {
    %c0_i32 = arith.constant 0 : i32
    %c0_i32_0 = arith.constant 0 : i32
    %c0_i32_1 = arith.constant 0 : i32
    %c0_i32_2 = arith.constant 0 : i32
    %c0_i32_3 = arith.constant 0 : i32
    return %c0_i32, %c0_i32_0, %c0_i32_1, %c0_i32_2 : i32, i32, i32, i32
  }
  func.func @transform_7(%arg0: i32) -> (i32, i32, i32, i32) {
    %c0_i32 = arith.constant 0 : i32
    %c0_i32_0 = arith.constant 0 : i32
    %c0_i32_1 = arith.constant 0 : i32
    %c0_i32_2 = arith.constant 0 : i32
    %c0_i32_3 = arith.constant 0 : i32
    return %c0_i32, %c0_i32_0, %c0_i32_1, %c0_i32_2 : i32, i32, i32, i32
  }
  func.func @transform_8(%arg0: i32) -> (i32, i32, i32, i32) {
    %c0_i32 = arith.constant 0 : i32
    %c0_i32_0 = arith.constant 0 : i32
    %c0_i32_1 = arith.constant 0 : i32
    %c0_i32_2 = arith.constant 0 : i32
    %c0_i32_3 = arith.constant 0 : i32
    return %c0_i32, %c0_i32_0, %c0_i32_1, %c0_i32_2 : i32, i32, i32, i32
  }
  func.func @transform_9(%arg0: i32) -> (i32, i32) {
    %c0_i32 = arith.constant 0 : i32
    %c0_i32_0 = arith.constant 0 : i32
    %c0_i32_1 = arith.constant 0 : i32
    return %c0_i32, %c0_i32_0 : i32, i32
  }
  func.func @transform_10(%arg0: i32) -> (i32, i32) {
    %c0_i32 = arith.constant 0 : i32
    %c0_i32_0 = arith.constant 0 : i32
    %c0_i32_1 = arith.constant 0 : i32
    return %c0_i32, %c0_i32_0 : i32, i32
  }
  func.func @transform_11(%arg0: i32) -> (i32, i32) {
    %c0_i32 = arith.constant 0 : i32
    %c0_i32_0 = arith.constant 0 : i32
    return %arg0, %c0_i32 : i32, i32
  }
}

</mosaic_0001>

<llo_original>
// kernel: baseline_forward.1
$region0: #{baseline_forward.1}
  #allocation0 [shape = 'u32[]', space=smem, size = 0x4, offset = 0x4, fixed_abs, tag = 'smem constant byte address 0x4 - core index']
  #allocation1 [shape = 'u32[144,128]{1,0:T(1,128)}', space=vmem, size = 0x12000, scoped, tag = 'internal scratch']
  #allocation2 [shape = 'f32[8,128]{1,0:T(8,128)}', space=vmem, size = 0x1000, scoped, tag = 'scratch operand']
  #allocation3 [shape = 'f32[1,1]{1,0:T(1,128)S(1)}', space=vmem, size = 0x200, scoped, tag = 'scoped memory for baseline_forward.1']
  %s0 = inlined_call_operand.hbm [shape: f32[8,32], index: 0, kind: input, shape index: {}]
  %s1 = inlined_call_operand.hbm [shape: f32[8,40], index: 1, kind: input, shape index: {}]
  %s2 = inlined_call_operand.vmem [shape: bf16[40,96], index: 2, kind: input, shape index: {}]
  %s3 = inlined_call_operand.hbm [shape: f32[1,96], index: 3, kind: input, shape index: {}]
  %s4 = inlined_call_operand.hbm [shape: bf16[128,256], index: 4, kind: input, shape index: {}]
  %s5 = inlined_call_operand.vmem [shape: f32[1,256], index: 5, kind: input, shape index: {}]
  %s6 = inlined_call_operand.hbm [shape: bf16[2,2,256,256], index: 6, kind: input, shape index: {}]
  %s7 = inlined_call_operand.vmem [shape: f32[2,2,1,256], index: 7, kind: input, shape index: {}]
  %s8 = inlined_call_operand.hbm [shape: f32[2,2,1,256], index: 8, kind: input, shape index: {}]
  %s9 = inlined_call_operand.vmem [shape: f32[1,256], index: 9, kind: input, shape index: {}]
  %s10 = inlined_call_operand.<no memory space> [shape: f32[1,1], index: 10, kind: input, shape index: {}]
  %s11 = inlined_call_operand.vmem [shape: f32[8,1], index: 11, kind: output, shape index: {}]
  %s12 = sld [smem:[#allocation0]]
  $region78: #{baseline_forward.1} parent=0
    _
  %s14 = ssub.s32 1, %s12
  %s15 = scalar_select 0, %s14, %s12
  %v16 = vstv %s10
  %17 = vst [vmem:[#allocation3] sm:$0x1] %v16
  $region1: #{baseline_forward.1} parent=0
    #allocation4 [shape = 'u8[4096]{0}', space=vmem, size = 0x1000, scoped, tag = 'input window, operand 0, single buffered']
    #allocation5 [shape = 's32[1]{0}', space=sflag, size = 0x4, scoped, tag = 'scoped memory for baseline_forward.1']
    #allocation6 [shape = 'u8[4096]{0}', space=vmem, size = 0x1000, scoped, tag = 'input window, operand 1, single buffered']
    #allocation7 [shape = 's32[1]{0}', space=sflag, size = 0x4, scoped, tag = 'scoped memory for baseline_forward.1']
    #allocation8 [shape = 'u8[512]{0}', space=vmem, size = 0x400, scoped, tag = 'input window, operand 3, single buffered']
    #allocation9 [shape = 'u8[65536]{0}', space=vmem, size = 0x10000, scoped, tag = 'input window, operand 4, single buffered']
    #allocation10 [shape = 's32[1]{0}', space=sflag, size = 0x4, scoped, tag = 'scoped memory for baseline_forward.1']
    #allocation11 [shape = 'u8[524288]{0}', space=vmem, size = 0x80000, scoped, tag = 'input window, operand 6, single buffered']
    #allocation12 [shape = 'u8[4096]{0}', space=vmem, size = 0x1000, scoped, tag = 'input window, operand 8, single buffered']
    #allocation13 [shape = 's32[1]{0}', space=sflag, size = 0x4, scoped, tag = 'scoped memory for baseline_forward.1']
    %18 = vsyncpa [#allocation5], 0
    %19 = vsyncpa [#allocation7], 0
    %20 = vsyncpa [#allocation10], 0
    %21 = vsyncpa [#allocation13], 0
    // Predicated region
    $region2: #{baseline_forward.1} parent=1 // pred_check
      _
    $region3: #{baseline_forward.1} parent=1 // pred_check_branch
      %23 = sbr.rel (0) target = $region5
    $region4: #{baseline_forward.1} parent=1 // pred_region
      %s25 = ssub.s32 128, 128
      %26 = vsyncadd [#allocation5], %s25
      %s28 = sshll.u32 [#allocation4], 4
      %s29 = int_to_ptr.vmem [resolvable:$true] %s28
      %31 = dma.hbm_to_vmem [thread:$0]  %s0, 128, %s29, [#allocation5]
    $region5: #{baseline_forward.1} parent=1 // pred_fallthru
      _
    // Predicated region
    $region6: #{baseline_forward.1} parent=1 // pred_check
      _
    $region7: #{baseline_forward.1} parent=1 // pred_check_branch
      %33 = sbr.rel (0) target = $region9
    $region8: #{baseline_forward.1} parent=1 // pred_region
      %s35 = ssub.s32 128, 128
      %36 = vsyncadd [#allocation7], %s35
      %s38 = sshll.u32 [#allocation6], 4
      %s39 = int_to_ptr.vmem [resolvable:$true] %s38
      %41 = dma.hbm_to_vmem [thread:$0]  %s1, 128, %s39, [#allocation7]
    $region9: #{baseline_forward.1} parent=1 // pred_fallthru
      _
    // Predicated region
    $region10: #{baseline_forward.1} parent=1 // pred_check
      _
    $region11: #{baseline_forward.1} parent=1 // pred_check_branch
      %43 = sbr.rel (0) target = $region13
    $region12: #{baseline_forward.1} parent=1 // pred_region
      _
    $region13: #{baseline_forward.1} parent=1 // pred_fallthru
      _
    // Predicated region
    $region14: #{baseline_forward.1} parent=1 // pred_check
      _
    $region15: #{baseline_forward.1} parent=1 // pred_check_branch
      %45 = sbr.rel (0) target = $region17
    $region16: #{baseline_forward.1} parent=1 // pred_region
      %s47 = ssub.s32 16, 16
      %48 = vsyncadd [#allocation7], %s47
      %s50 = sshll.u32 [#allocation8], 4
      %s51 = int_to_ptr.vmem [resolvable:$true] %s50
      %53 = dma.hbm_to_vmem [thread:$0]  %s3, 16, %s51, [#allocation7]
    $region17: #{baseline_forward.1} parent=1 // pred_fallthru
      _
    // Predicated region
    $region18: #{baseline_forward.1} parent=1 // pred_check
      _
    $region19: #{baseline_forward.1} parent=1 // pred_check_branch
      %55 = sbr.rel (0) target = $region21
    $region20: #{baseline_forward.1} parent=1 // pred_region
      %s57 = ssub.s32 2048, 2048
      %58 = vsyncadd [#allocation10], %s57
      %s59 = sshll.u32 [#allocation9], 4
      %s60 = int_to_ptr.vmem [resolvable:$true] %s59
      %65 = dma.hbm_to_vmem [thread:$0]  %s4, 2048, %s60, [#allocation10], 128, 128, 8
    $region21: #{baseline_forward.1} parent=1 // pred_fallthru
      _
    // Predicated region
    $region22: #{baseline_forward.1} parent=1 // pred_check
      _
    $region23: #{baseline_forward.1} parent=1 // pred_check_branch
      %67 = sbr.rel (0) target = $region25
    $region24: #{baseline_forward.1} parent=1 // pred_region
      _
    $region25: #{baseline_forward.1} parent=1 // pred_fallthru
      _
    // Predicated region
    $region26: #{baseline_forward.1} parent=1 // pred_check
      _
    $region27: #{baseline_forward.1} parent=1 // pred_check_branch
      %69 = sbr.rel (0) target = $region29
    $region28: #{baseline_forward.1} parent=1 // pred_region
      %s71 = ssub.s32 16384, 16384
      %72 = vsyncadd [#allocation10], %s71
      %s73 = sshll.u32 [#allocation11], 4
      %s74 = int_to_ptr.vmem [resolvable:$true] %s73
      %79 = dma.hbm_to_vmem [thread:$0]  %s6, 16384, %s74, [#allocation10], 128, 128, 8
    $region29: #{baseline_forward.1} parent=1 // pred_fallthru
      _
    // Predicated region
    $region30: #{baseline_forward.1} parent=1 // pred_check
      _
    $region31: #{baseline_forward.1} parent=1 // pred_check_branch
      %81 = sbr.rel (0) target = $region33
    $region32: #{baseline_forward.1} parent=1 // pred_region
      _
    $region33: #{baseline_forward.1} parent=1 // pred_fallthru
      _
    // Predicated region
    $region34: #{baseline_forward.1} parent=1 // pred_check
      _
    $region35: #{baseline_forward.1} parent=1 // pred_check_branch
      %83 = sbr.rel (0) target = $region37
    $region36: #{baseline_forward.1} parent=1 // pred_region
      %s85 = ssub.s32 128, 128
      %86 = vsyncadd [#allocation13], %s85
      %s87 = sshll.u32 [#allocation12], 4
      %s88 = int_to_ptr.vmem [resolvable:$true] %s87
      %93 = dma.hbm_to_vmem [thread:$0]  %s8, 128, %s88, [#allocation13], 32, 32, 2
    $region37: #{baseline_forward.1} parent=1 // pred_fallthru
      _
    // Predicated region
    $region38: #{baseline_forward.1} parent=1 // pred_check
      _
    $region39: #{baseline_forward.1} parent=1 // pred_check_branch
      %95 = sbr.rel (0) target = $region41
    $region40: #{baseline_forward.1} parent=1 // pred_region
      _
    $region41: #{baseline_forward.1} parent=1 // pred_fallthru
      _
    // Predicated region
    $region42: #{baseline_forward.1} parent=1 // pred_check
      _
    $region43: #{baseline_forward.1} parent=1 // pred_check_branch
      %97 = sbr.rel (0) target = $region45
    $region44: #{baseline_forward.1} parent=1 // pred_region
      _
    $region45: #{baseline_forward.1} parent=1 // pred_fallthru
      _
    // Predicated region
    $region46: #{baseline_forward.1} parent=1 // pred_check
      _
    $region47: #{baseline_forward.1} parent=1 // pred_check_branch
      %99 = sbr.rel (0) target = $region49
    $region48: #{baseline_forward.1} parent=1 // pred_region
      %100 = dma.done [#allocation5], 128
    $region49: #{baseline_forward.1} parent=1 // pred_fallthru
      _
    // Predicated region
    $region50: #{baseline_forward.1} parent=1 // pred_check
      _
    $region51: #{baseline_forward.1} parent=1 // pred_check_branch
      %102 = sbr.rel (0) target = $region53
    $region52: #{baseline_forward.1} parent=1 // pred_region
      %103 = dma.done [#allocation7], 128
    $region53: #{baseline_forward.1} parent=1 // pred_fallthru
      _
    // Predicated region
    $region54: #{baseline_forward.1} parent=1 // pred_check
      _
    $region55: #{baseline_forward.1} parent=1 // pred_check_branch
      %105 = sbr.rel (0) target = $region57
    $region56: #{baseline_forward.1} parent=1 // pred_region
      %106 = dma.done [#allocation7], 16
    $region57: #{baseline_forward.1} parent=1 // pred_fallthru
      _
    // Predicated region
    $region58: #{baseline_forward.1} parent=1 // pred_check
      _
    $region59: #{baseline_forward.1} parent=1 // pred_check_branch
      %108 = sbr.rel (0) target = $region61
    $region60: #{baseline_forward.1} parent=1 // pred_region
      %109 = dma.done [#allocation10], 2048
    $region61: #{baseline_forward.1} parent=1 // pred_fallthru
      _
    // Predicated region
    $region62: #{baseline_forward.1} parent=1 // pred_check
      _
    $region63: #{baseline_forward.1} parent=1 // pred_check_branch
      %111 = sbr.rel (0) target = $region65
    $region64: #{baseline_forward.1} parent=1 // pred_region
      %112 = dma.done [#allocation10], 16384
    $region65: #{baseline_forward.1} parent=1 // pred_fallthru
      _
    // Predicated region
    $region66: #{baseline_forward.1} parent=1 // pred_check
      _
    $region67: #{baseline_forward.1} parent=1 // pred_check_branch
      %114 = sbr.rel (0) target = $region69
    $region68: #{baseline_forward.1} parent=1 // pred_region
      %115 = dma.done [#allocation13], 128
    $region69: #{baseline_forward.1} parent=1 // pred_fallthru
      _
    %v117 = vld [vmem:[#allocation6] sm:$0xff]
    %v118 = vadd.f32 %v117, 1.0
    %v119 = vlog2.pop %v118
    %v120 = vmul.f32 %v119, 0.6931472
    %v121 = vpack.c.bf16 %v120, %v120
    %v122 = vld [vmem:[%s2] sm:$0xf]
    %v123 = vld [vmem:[%s2 + $0x4] sm:$0xf]
    %v124 = vld [vmem:[%s2 + $0x8] sm:$0xf]
    %v125 = vld [vmem:[%s2 + $0xc] sm:$0xf]
    %v126 = vld [vmem:[%s2 + $0x10] sm:$0xf]
    %v127 = vld [vmem:[#allocation8] sm:$0x1]
    %v129 = vlaneseq
    %v130 = vshrl.u32 %v129, 7
    %v131 = vsub.s32 0, %v130
    %v132 = vrot.slane %v127, %v131
    %v139 = vunpack.c.l.b16 %v122
    %v140 = vunpack.c.l.b16 %v123
    %v141 = vunpack.c.l.b16 %v124
    %v142 = vunpack.c.l.b16 %v125
    %v143 = vunpack.c.l.b16 %v126
    %v144 = vpack.c.b16 %v140, %v139
    %v145 = vpack.c.b16 %v142, %v141
    %v146 = vpack.c.b16 %v143, %v143
    %vm149 = vcmask 326656
    %v151 = vsel %vm149, %v121, 0
    %vm153 = vcmask 1043456
    %v155 = vsel %vm153, %v146, 0
    %157 = vmatprep.subr.bf16.mxu0 0
    %158 = vmatpush1.bf16.msra.mxu0 %v144
    %159 = vmatprep.subr.bf16.mxu0 0
    %160 = vmatpush1.bf16.msra.mxu0 %v145
    %161 = vmatprep.subr.bf16.mxu0 0
    %162 = vmatpush1.bf16.msra.mxu0 %v155
    %163 = vmatprep.subr.bf16.mxu0 0
    %164 = vmatpush1.bf16.msra.mxu0 0
    %165 = vmatprep.subr.bf16.mxu0 0
    %166 = vmatpush1.bf16.msra.mxu0 0
    %167 = vmatprep.subr.bf16.mxu0 0
    %168 = vmatpush1.bf16.msra.mxu0 0
    %169 = vmatprep.subr.bf16.mxu0 0
    %170 = vmatpush1.bf16.msra.mxu0 0
    %171 = vmatprep.subr.bf16.mxu0 0
    %172 = vmatpush1.bf16.msra.mxu0 0
    %173 = vmatprep.subr.bf16.mxu0 0
    %174 = vmatpush1.bf16.msra.mxu0 0
    %175 = vmatprep.subr.bf16.mxu0 0
    %176 = vmatpush1.bf16.msra.mxu0 0
    %177 = vmatprep.subr.bf16.mxu0 0
    %178 = vmatpush1.bf16.msra.mxu0 0
    %179 = vmatprep.subr.bf16.mxu0 0
    %180 = vmatpush1.bf16.msra.mxu0 0
    %181 = vmatprep.subr.bf16.mxu0 0
    %182 = vmatpush1.bf16.msra.mxu0 0
    %183 = vmatprep.subr.bf16.mxu0 0
    %184 = vmatpush1.bf16.msra.mxu0 0
    %185 = vmatprep.subr.bf16.mxu0 0
    %186 = vmatpush1.bf16.msra.mxu0 0
    %187 = vmatprep.subr.bf16.mxu0 0
    %188 = vmatpush1.bf16.msra.mxu0 0
    %189 = vmatprep.mubr.bf16.mxu0 0
    %190 = vmatmul.mubr.bf16.gmra.mrb[0].mxu0 %v151
    %v191 = vpop.f32.mrb[0].mxu0
    %v192 = vadd.f32 %v132, %v191
    %v193 = vpop.f32.mrb[0].mxu0
    %v194 = vpop.f32.mrb[0].mxu0
    %v195 = vpop.f32.mrb[0].mxu0
    %196 = vdwg.mxu0
    %v197 = vmax.f32 %v192, 0.0
    %v198 = vld [vmem:[#allocation4] sm:$0xff]
    %vm199 = vcmask 261120
    %200 = vst.msk [vmem:[#allocation2] sm:$0xff] %vm199, %v198
    %202 = vrot.lane.b32.xlu0 %v197, 32
    %v203 = vpop.permute.xlu0 %202
    %vm205 = vcmask 1047808
    %206 = vst.msk [vmem:[#allocation2] sm:$0xff] %vm205, %v203
    %v207 = vld [vmem:[#allocation2] sm:$0xff]
    %v208 = vpack.c.bf16 %v207, %v207
    %v209 = vld [vmem:[#allocation9] sm:$0xff]
    %v210 = vld [vmem:[#allocation9 + $0x8] sm:$0xff]
    %v211 = vld [vmem:[#allocation9 + $0x10] sm:$0xff]
    %v212 = vld [vmem:[#allocation9 + $0x18] sm:$0xff]
    %v213 = vld [vmem:[#allocation9 + $0x20] sm:$0xff]
    %v214 = vld [vmem:[#allocation9 + $0x28] sm:$0xff]
    %v215 = vld [vmem:[#allocation9 + $0x30] sm:$0xff]
    %v216 = vld [vmem:[#allocation9 + $0x38] sm:$0xff]
    %v217 = vld [vmem:[#allocation9 + $0x40] sm:$0xff]
    %v218 = vld [vmem:[#allocation9 + $0x48] sm:$0xff]
    %v219 = vld [vmem:[#allocation9 + $0x50] sm:$0xff]
    %v220 = vld [vmem:[#allocation9 + $0x58] sm:$0xff]
    %v221 = vld [vmem:[#allocation9 + $0x60] sm:$0xff]
    %v222 = vld [vmem:[#allocation9 + $0x68] sm:$0xff]
    %v223 = vld [vmem:[#allocation9 + $0x70] sm:$0xff]
    %v224 = vld [vmem:[#allocation9 + $0x78] sm:$0xff]
    %v225 = vld [vmem:[%s5] sm:$0x3]
    %v227 = vlaneseq
    %v228 = vshrl.u32 %v227, 7
    %v229 = vsub.s32 0, %v228
    %v230 = vrot.slane %v225, %v229
    %v231 = vlaneseq
    %v232 = vshrl.u32 %v231, 7
    %v233 = vsub.s32 1, %v232
    %v234 = vrot.slane %v225, %v233
    %v253 = vunpack.c.l.b16 %v209
    %v254 = vunpack.c.h.b16 %v209
    %v255 = vunpack.c.l.b16 %v210
    %v256 = vunpack.c.h.b16 %v210
    %v257 = vunpack.c.l.b16 %v211
    %v258 = vunpack.c.h.b16 %v211
    %v259 = vunpack.c.l.b16 %v212
    %v260 = vunpack.c.h.b16 %v212
    %v261 = vunpack.c.l.b16 %v213
    %v262 = vunpack.c.h.b16 %v213
    %v263 = vunpack.c.l.b16 %v214
    %v264 = vunpack.c.h.b16 %v214
    %v265 = vunpack.c.l.b16 %v215
    %v266 = vunpack.c.h.b16 %v215
    %v267 = vunpack.c.l.b16 %v216
    %v268 = vunpack.c.h.b16 %v216
    %v269 = vunpack.c.l.b16 %v217
    %v270 = vunpack.c.h.b16 %v217
    %v271 = vunpack.c.l.b16 %v218
    %v272 = vunpack.c.h.b16 %v218
    %v273 = vunpack.c.l.b16 %v219
    %v274 = vunpack.c.h.b16 %v219
    %v275 = vunpack.c.l.b16 %v220
    %v276 = vunpack.c.h.b16 %v220
    %v277 = vunpack.c.l.b16 %v221
    %v278 = vunpack.c.h.b16 %v221
    %v279 = vunpack.c.l.b16 %v222
    %v280 = vunpack.c.h.b16 %v222
    %v281 = vunpack.c.l.b16 %v223
    %v282 = vunpack.c.h.b16 %v223
    %v283 = vunpack.c.l.b16 %v224
    %v284 = vunpack.c.h.b16 %v224
    %v285 = vpack.c.b16 %v255, %v253
    %v286 = vpack.c.b16 %v256, %v254
    %v287 = vpack.c.b16 %v259, %v257
    %v288 = vpack.c.b16 %v260, %v258
    %v289 = vpack.c.b16 %v263, %v261
    %v290 = vpack.c.b16 %v264, %v262
    %v291 = vpack.c.b16 %v267, %v265
    %v292 = vpack.c.b16 %v268, %v266
    %v293 = vpack.c.b16 %v271, %v269
    %v294 = vpack.c.b16 %v272, %v270
    %v295 = vpack.c.b16 %v275, %v273
    %v296 = vpack.c.b16 %v276, %v274
    %v297 = vpack.c.b16 %v279, %v277
    %v298 = vpack.c.b16 %v280, %v278
    %v299 = vpack.c.b16 %v283, %v281
    %v300 = vpack.c.b16 %v284, %v282
    %317 = vmatprep.subr.bf16.mxu0 %v286
    %318 = vmatpush1.bf16.msra.mxu0 %v285
    %319 = vmatprep.subr.bf16.mxu0 %v288
    %320 = vmatpush1.bf16.msra.mxu0 %v287
    %321 = vmatprep.subr.bf16.mxu0 %v290
    %322 = vmatpush1.bf16.msra.mxu0 %v289
    %323 = vmatprep.subr.bf16.mxu0 %v292
    %324 = vmatpush1.bf16.msra.mxu0 %v291
    %325 = vmatprep.subr.bf16.mxu0 %v294
    %326 = vmatpush1.bf16.msra.mxu0 %v293
    %327 = vmatprep.subr.bf16.mxu0 %v296
    %328 = vmatpush1.bf16.msra.mxu0 %v295
    %329 = vmatprep.subr.bf16.mxu0 %v298
    %330 = vmatpush1.bf16.msra.mxu0 %v297
    %331 = vmatprep.subr.bf16.mxu0 %v300
    %332 = vmatpush1.bf16.msra.mxu0 %v299
    %333 = vmatprep.subr.bf16.mxu0 0
    %334 = vmatpush1.bf16.msra.mxu0 0
    %335 = vmatprep.subr.bf16.mxu0 0
    %336 = vmatpush1.bf16.msra.mxu0 0
    %337 = vmatprep.subr.bf16.mxu0 0
    %338 = vmatpush1.bf16.msra.mxu0 0
    %339 = vmatprep.subr.bf16.mxu0 0
    %340 = vmatpush1.bf16.msra.mxu0 0
    %341 = vmatprep.subr.bf16.mxu0 0
    %342 = vmatpush1.bf16.msra.mxu0 0
    %343 = vmatprep.subr.bf16.mxu0 0
    %344 = vmatpush1.bf16.msra.mxu0 0
    %345 = vmatprep.subr.bf16.mxu0 0
    %346 = vmatpush1.bf16.msra.mxu0 0
    %347 = vmatprep.subr.bf16.mxu0 0
    %348 = vmatpush1.bf16.msra.mxu0 0
    %349 = vmatprep.mubr.bf16.mxu0 0
    %350 = vmatmul.mubr.bf16.gmra.mrb[0].mxu0 %v208
    %v351 = vpop.f32.mrb[0].mxu0
    %v352 = vadd.f32 %v230, %v351
    %v353 = vpop.f32.mrb[0].mxu0
    %v354 = vadd.f32 %v234, %v353
    %v355 = vpop.f32.mrb[0].mxu0
    %v356 = vpop.f32.mrb[0].mxu0
    %357 = vdwg.mxu0
    %v358 = vpack.c.bf16 %v352, %v352
    %v359 = vpack.c.bf16 %v354, %v354
    %v360 = vld [vmem:[#allocation11] sm:$0xff]
    %v361 = vld [vmem:[#allocation11 + $0x8] sm:$0xff]
    %v362 = vld [vmem:[#allocation11 + $0x10] sm:$0xff]
    %v363 = vld [vmem:[#allocation11 + $0x18] sm:$0xff]
    %v364 = vld [vmem:[#allocation11 + $0x20] sm:$0xff]
    %v365 = vld [vmem:[#allocation11 + $0x28] sm:$0xff]
    %v366 = vld [vmem:[#allocation11 + $0x30] sm:$0xff]
    %v367 = vld [vmem:[#allocation11 + $0x38] sm:$0xff]
    %v368 = vld [vmem:[#allocation11 + $0x40] sm:$0xff]
    %v369 = vld [vmem:[#allocation11 + $0x48] sm:$0xff]
    %v370 = vld [vmem:[#allocation11 + $0x50] sm:$0xff]
    %v371 = vld [vmem:[#allocation11 + $0x58] sm:$0xff]
    %v372 = vld [vmem:[#allocation11 + $0x60] sm:$0xff]
    %v373 = vld [vmem:[#allocation11 + $0x68] sm:$0xff]
    %v374 = vld [vmem:[#allocation11 + $0x70] sm:$0xff]
    %v375 = vld [vmem:[#allocation11 + $0x78] sm:$0xff]
    %v376 = vld [vmem:[#allocation11 + $0x80] sm:$0xff]
    %v377 = vld [vmem:[#allocation11 + $0x88] sm:$0xff]
    %v378 = vld [vmem:[#allocation11 + $0x90] sm:$0xff]
    %v379 = vld [vmem:[#allocation11 + $0x98] sm:$0xff]
    %v380 = vld [vmem:[#allocation11 + $0xa0] sm:$0xff]
    %v381 = vld [vmem:[#allocation11 + $0xa8] sm:$0xff]
    %v382 = vld [vmem:[#allocation11 + $0xb0] sm:$0xff]
    %v383 = vld [vmem:[#allocation11 + $0xb8] sm:$0xff]
    %v384 = vld [vmem:[#allocation11 + $0xc0] sm:$0xff]
    %v385 = vld [vmem:[#allocation11 + $0xc8] sm:$0xff]
    %v386 = vld [vmem:[#allocation11 + $0xd0] sm:$0xff]
    %v387 = vld [vmem:[#allocation11 + $0xd8] sm:$0xff]
    %v388 = vld [vmem:[#allocation11 + $0xe0] sm:$0xff]
    %v389 = vld [vmem:[#allocation11 + $0xe8] sm:$0xff]
    %v390 = vld [vmem:[#allocation11 + $0xf0] sm:$0xff]
    %v391 = vld [vmem:[#allocation11 + $0xf8] sm:$0xff]
    %v424 = vunpack.c.l.b16 %v360
    %v425 = vunpack.c.h.b16 %v360
    %v426 = vunpack.c.l.b16 %v361
    %v427 = vunpack.c.h.b16 %v361
    %v428 = vunpack.c.l.b16 %v362
    %v429 = vunpack.c.h.b16 %v362
    %v430 = vunpack.c.l.b16 %v363
    %v431 = vunpack.c.h.b16 %v363
    %v432 = vunpack.c.l.b16 %v364
    %v433 = vunpack.c.h.b16 %v364
    %v434 = vunpack.c.l.b16 %v365
    %v435 = vunpack.c.h.b16 %v365
    %v436 = vunpack.c.l.b16 %v366
    %v437 = vunpack.c.h.b16 %v366
    %v438 = vunpack.c.l.b16 %v367
    %v439 = vunpack.c.h.b16 %v367
    %v440 = vunpack.c.l.b16 %v368
    %v441 = vunpack.c.h.b16 %v368
    %v442 = vunpack.c.l.b16 %v369
    %v443 = vunpack.c.h.b16 %v369
    %v444 = vunpack.c.l.b16 %v370
    %v445 = vunpack.c.h.b16 %v370
    %v446 = vunpack.c.l.b16 %v371
    %v447 = vunpack.c.h.b16 %v371
    %v448 = vunpack.c.l.b16 %v372
    %v449 = vunpack.c.h.b16 %v372
    %v450 = vunpack.c.l.b16 %v373
    %v451 = vunpack.c.h.b16 %v373
    %v452 = vunpack.c.l.b16 %v374
    %v453 = vunpack.c.h.b16 %v374
    %v454 = vunpack.c.l.b16 %v375
    %v455 = vunpack.c.h.b16 %v375
    %v456 = vunpack.c.l.b16 %v376
    %v457 = vunpack.c.h.b16 %v376
    %v458 = vunpack.c.l.b16 %v377
    %v459 = vunpack.c.h.b16 %v377
    %v460 = vunpack.c.l.b16 %v378
    %v461 = vunpack.c.h.b16 %v378
    %v462 = vunpack.c.l.b16 %v379
    %v463 = vunpack.c.h.b16 %v379
    %v464 = vunpack.c.l.b16 %v380
    %v465 = vunpack.c.h.b16 %v380
    %v466 = vunpack.c.l.b16 %v381
    %v467 = vunpack.c.h.b16 %v381
    %v468 = vunpack.c.l.b16 %v382
    %v469 = vunpack.c.h.b16 %v382
    %v470 = vunpack.c.l.b16 %v383
    %v471 = vunpack.c.h.b16 %v383
    %v472 = vunpack.c.l.b16 %v384
    %v473 = vunpack.c.h.b16 %v384
    %v474 = vunpack.c.l.b16 %v385
    %v475 = vunpack.c.h.b16 %v385
    %v476 = vunpack.c.l.b16 %v386
    %v477 = vunpack.c.h.b16 %v386
    %v478 = vunpack.c.l.b16 %v387
    %v479 = vunpack.c.h.b16 %v387
    %v480 = vunpack.c.l.b16 %v388
    %v481 = vunpack.c.h.b16 %v388
    %v482 = vunpack.c.l.b16 %v389
    %v483 = vunpack.c.h.b16 %v389
    %v484 = vunpack.c.l.b16 %v390
    %v485 = vunpack.c.h.b16 %v390
    %v486 = vunpack.c.l.b16 %v391
    %v487 = vunpack.c.h.b16 %v391
    %v488 = vpack.c.b16 %v426, %v424
    %v489 = vpack.c.b16 %v427, %v425
    %v490 = vpack.c.b16 %v430, %v428
    %v491 = vpack.c.b16 %v431, %v429
    %v492 = vpack.c.b16 %v434, %v432
    %v493 = vpack.c.b16 %v435, %v433
    %v494 = vpack.c.b16 %v438, %v436
    %v495 = vpack.c.b16 %v439, %v437
    %v496 = vpack.c.b16 %v442, %v440
    %v497 = vpack.c.b16 %v443, %v441
    %v498 = vpack.c.b16 %v446, %v444
    %v499 = vpack.c.b16 %v447, %v445
    %v500 = vpack.c.b16 %v450, %v448
    %v501 = vpack.c.b16 %v451, %v449
    %v502 = vpack.c.b16 %v454, %v452
    %v503 = vpack.c.b16 %v455, %v453
    %v504 = vpack.c.b16 %v458, %v456
    %v505 = vpack.c.b16 %v459, %v457
    %v506 = vpack.c.b16 %v462, %v460
    %v507 = vpack.c.b16 %v463, %v461
    %v508 = vpack.c.b16 %v466, %v464
    %v509 = vpack.c.b16 %v467, %v465
    %v510 = vpack.c.b16 %v470, %v468
    %v511 = vpack.c.b16 %v471, %v469
    %v512 = vpack.c.b16 %v474, %v472
    %v513 = vpack.c.b16 %v475, %v473
    %v514 = vpack.c.b16 %v478, %v476
    %v515 = vpack.c.b16 %v479, %v477
    %v516 = vpack.c.b16 %v482, %v480
    %v517 = vpack.c.b16 %v483, %v481
    %v518 = vpack.c.b16 %v486, %v484
    %v519 = vpack.c.b16 %v487, %v485
    %552 = vmatprep.subr.bf16.mxu0 %v489
    %553 = vmatpush1.bf16.msra.mxu0 %v488
    %554 = vmatprep.subr.bf16.mxu0 %v491
    %555 = vmatpush1.bf16.msra.mxu0 %v490
    %556 = vmatprep.subr.bf16.mxu0 %v493
    %557 = vmatpush1.bf16.msra.mxu0 %v492
    %558 = vmatprep.subr.bf16.mxu0 %v495
    %559 = vmatpush1.bf16.msra.mxu0 %v494
    %560 = vmatprep.subr.bf16.mxu0 %v497
    %561 = vmatpush1.bf16.msra.mxu0 %v496
    %562 = vmatprep.subr.bf16.mxu0 %v499
    %563 = vmatpush1.bf16.msra.mxu0 %v498
    %564 = vmatprep.subr.bf16.mxu0 %v501
    %565 = vmatpush1.bf16.msra.mxu0 %v500
    %566 = vmatprep.subr.bf16.mxu0 %v503
    %567 = vmatpush1.bf16.msra.mxu0 %v502
    %568 = vmatprep.subr.bf16.mxu0 %v505
    %569 = vmatpush1.bf16.msra.mxu0 %v504
    %570 = vmatprep.subr.bf16.mxu0 %v507
    %571 = vmatpush1.bf16.msra.mxu0 %v506
    %572 = vmatprep.subr.bf16.mxu0 %v509
    %573 = vmatpush1.bf16.msra.mxu0 %v508
    %574 = vmatprep.subr.bf16.mxu0 %v511
    %575 = vmatpush1.bf16.msra.mxu0 %v510
    %576 = vmatprep.subr.bf16.mxu0 %v513
    %577 = vmatpush1.bf16.msra.mxu0 %v512
    %578 = vmatprep.subr.bf16.mxu0 %v515
    %579 = vmatpush1.bf16.msra.mxu0 %v514
    %580 = vmatprep.subr.bf16.mxu0 %v517
    %581 = vmatpush1.bf16.msra.mxu0 %v516
    %582 = vmatprep.subr.bf16.mxu0 %v519
    %583 = vmatpush1.bf16.msra.mxu0 %v518
    %584 = vmatprep.mubr.bf16.mxu0 %v359
    %585 = vmatmul.mubr.bf16.gmra.mrb[0].mxu0 %v358
    %v586 = vpop.f32.mrb[0].mxu0
    %v587 = vadd.f32 0.0, %v586
    %v588 = vpop.f32.mrb[0].mxu0
    %v589 = vadd.f32 0.0, %v588
    %v590 = vpop.f32.mrb[0].mxu0
    %v591 = vpop.f32.mrb[0].mxu0
    %592 = vdwg.mxu0
    %v593 = vld [vmem:[%s7] sm:$0x3]
    %v594 = vld [vmem:[#allocation12] sm:$0x3]
    %v595 = vadd.f32 %v587, %v589
    %596 = vadd.xlane.f32.xlu0 %v595
    %v597 = vpop.xlane.xlu0 %596
    %v598 = vrcp.pop 256.0
    %v599 = vmul.f32 %v597, %v598
    %v600 = vsub.f32 %v587, %v599
    %v601 = vsub.f32 %v589, %v599
    %v602 = vmul.f32 %v600, %v600
    %v603 = vmul.f32 %v601, %v601
    %v604 = vadd.f32 %v602, %v603
    %605 = vadd.xlane.f32.xlu0 %v604
    %v606 = vpop.xlane.xlu0 %605
    %v607 = vmul.f32 %v606, %v598
    %v608 = vadd.f32 %v607, 1e-05
    %v609 = vrsqrt.pop %v608
    %v610 = vmul.f32 %v600, %v609
    %v611 = vmul.f32 %v601, %v609
    %v613 = vlaneseq
    %v614 = vshrl.u32 %v613, 7
    %v615 = vsub.s32 0, %v614
    %v616 = vrot.slane %v593, %v615
    %v617 = vlaneseq
    %v618 = vshrl.u32 %v617, 7
    %v619 = vsub.s32 1, %v618
    %v620 = vrot.slane %v593, %v619
    %v623 = vmul.f32 %v610, %v616
    %v624 = vmul.f32 %v611, %v620
    %v626 = vlaneseq
    %v627 = vshrl.u32 %v626, 7
    %v628 = vsub.s32 0, %v627
    %v629 = vrot.slane %v594, %v628
    %v630 = vlaneseq
    %v631 = vshrl.u32 %v630, 7
    %v632 = vsub.s32 1, %v631
    %v633 = vrot.slane %v594, %v632
    %v636 = vadd.f32 %v623, %v629
    %v637 = vadd.f32 %v624, %v633
    %v638 = vmax.f32 %v636, 0.0
    %v639 = vmax.f32 %v637, 0.0
    %v640 = vpack.c.bf16 %v638, %v638
    %v641 = vpack.c.bf16 %v639, %v639
    %s642 = scalar_lea.vmem [#allocation11], 256
    %v643 = vld [vmem:[%s642] sm:$0xff]
    %v644 = vld [vmem:[%s642 + $0x8] sm:$0xff]
    %v645 = vld [vmem:[%s642 + $0x10] sm:$0xff]
    %v646 = vld [vmem:[%s642 + $0x18] sm:$0xff]
    %v647 = vld [vmem:[%s642 + $0x20] sm:$0xff]
    %v648 = vld [vmem:[%s642 + $0x28] sm:$0xff]
    %v649 = vld [vmem:[%s642 + $0x30] sm:$0xff]
    %v650 = vld [vmem:[%s642 + $0x38] sm:$0xff]
    %v651 = vld [vmem:[%s642 + $0x40] sm:$0xff]
    %v652 = vld [vmem:[%s642 + $0x48] sm:$0xff]
    %v653 = vld [vmem:[%s642 + $0x50] sm:$0xff]
    %v654 = vld [vmem:[%s642 + $0x58] sm:$0xff]
    %v655 = vld [vmem:[%s642 + $0x60] sm:$0xff]
    %v656 = vld [vmem:[%s642 + $0x68] sm:$0xff]
    %v657 = vld [vmem:[%s642 + $0x70] sm:$0xff]
    %v658 = vld [vmem:[%s642 + $0x78] sm:$0xff]
    %v659 = vld [vmem:[%s642 + $0x80] sm:$0xff]
    %v660 = vld [vmem:[%s642 + $0x88] sm:$0xff]
    %v661 = vld [vmem:[%s642 + $0x90] sm:$0xff]
    %v662 = vld [vmem:[%s642 + $0x98] sm:$0xff]
    %v663 = vld [vmem:[%s642 + $0xa0] sm:$0xff]
    %v664 = vld [vmem:[%s642 + $0xa8] sm:$0xff]
    %v665 = vld [vmem:[%s642 + $0xb0] sm:$0xff]
    %v666 = vld [vmem:[%s642 + $0xb8] sm:$0xff]
    %v667 = vld [vmem:[%s642 + $0xc0] sm:$0xff]
    %v668 = vld [vmem:[%s642 + $0xc8] sm:$0xff]
    %v669 = vld [vmem:[%s642 + $0xd0] sm:$0xff]
    %v670 = vld [vmem:[%s642 + $0xd8] sm:$0xff]
    %v671 = vld [vmem:[%s642 + $0xe0] sm:$0xff]
    %v672 = vld [vmem:[%s642 + $0xe8] sm:$0xff]
    %v673 = vld [vmem:[%s642 + $0xf0] sm:$0xff]
    %v674 = vld [vmem:[%s642 + $0xf8] sm:$0xff]
    %v707 = vunpack.c.l.b16 %v643
    %v708 = vunpack.c.h.b16 %v643
    %v709 = vunpack.c.l.b16 %v644
    %v710 = vunpack.c.h.b16 %v644
    %v711 = vunpack.c.l.b16 %v645
    %v712 = vunpack.c.h.b16 %v645
    %v713 = vunpack.c.l.b16 %v646
    %v714 = vunpack.c.h.b16 %v646
    %v715 = vunpack.c.l.b16 %v647
    %v716 = vunpack.c.h.b16 %v647
    %v717 = vunpack.c.l.b16 %v648
    %v718 = vunpack.c.h.b16 %v648
    %v719 = vunpack.c.l.b16 %v649
    %v720 = vunpack.c.h.b16 %v649
    %v721 = vunpack.c.l.b16 %v650
    %v722 = vunpack.c.h.b16 %v650
    %v723 = vunpack.c.l.b16 %v651
    %v724 = vunpack.c.h.b16 %v651
    %v725 = vunpack.c.l.b16 %v652
    %v726 = vunpack.c.h.b16 %v652
    %v727 = vunpack.c.l.b16 %v653
    %v728 = vunpack.c.h.b16 %v653
    %v729 = vunpack.c.l.b16 %v654
    %v730 = vunpack.c.h.b16 %v654
    %v731 = vunpack.c.l.b16 %v655
    %v732 = vunpack.c.h.b16 %v655
    %v733 = vunpack.c.l.b16 %v656
    %v734 = vunpack.c.h.b16 %v656
    %v735 = vunpack.c.l.b16 %v657
    %v736 = vunpack.c.h.b16 %v657
    %v737 = vunpack.c.l.b16 %v658
    %v738 = vunpack.c.h.b16 %v658
    %v739 = vunpack.c.l.b16 %v659
    %v740 = vunpack.c.h.b16 %v659
    %v741 = vunpack.c.l.b16 %v660
    %v742 = vunpack.c.h.b16 %v660
    %v743 = vunpack.c.l.b16 %v661
    %v744 = vunpack.c.h.b16 %v661
    %v745 = vunpack.c.l.b16 %v662
    %v746 = vunpack.c.h.b16 %v662
    %v747 = vunpack.c.l.b16 %v663
    %v748 = vunpack.c.h.b16 %v663
    %v749 = vunpack.c.l.b16 %v664
    %v750 = vunpack.c.h.b16 %v664
    %v751 = vunpack.c.l.b16 %v665
    %v752 = vunpack.c.h.b16 %v665
    %v753 = vunpack.c.l.b16 %v666
    %v754 = vunpack.c.h.b16 %v666
    %v755 = vunpack.c.l.b16 %v667
    %v756 = vunpack.c.h.b16 %v667
    %v757 = vunpack.c.l.b16 %v668
    %v758 = vunpack.c.h.b16 %v668
    %v759 = vunpack.c.l.b16 %v669
    %v760 = vunpack.c.h.b16 %v669
    %v761 = vunpack.c.l.b16 %v670
    %v762 = vunpack.c.h.b16 %v670
    %v763 = vunpack.c.l.b16 %v671
    %v764 = vunpack.c.h.b16 %v671
    %v765 = vunpack.c.l.b16 %v672
    %v766 = vunpack.c.h.b16 %v672
    %v767 = vunpack.c.l.b16 %v673
    %v768 = vunpack.c.h.b16 %v673
    %v769 = vunpack.c.l.b16 %v674
    %v770 = vunpack.c.h.b16 %v674
    %v771 = vpack.c.b16 %v709, %v707
    %v772 = vpack.c.b16 %v710, %v708
    %v773 = vpack.c.b16 %v713, %v711
    %v774 = vpack.c.b16 %v714, %v712
    %v775 = vpack.c.b16 %v717, %v715
    %v776 = vpack.c.b16 %v718, %v716
    %v777 = vpack.c.b16 %v721, %v719
    %v778 = vpack.c.b16 %v722, %v720
    %v779 = vpack.c.b16 %v725, %v723
    %v780 = vpack.c.b16 %v726, %v724
    %v781 = vpack.c.b16 %v729, %v727
    %v782 = vpack.c.b16 %v730, %v728
    %v783 = vpack.c.b16 %v733, %v731
    %v784 = vpack.c.b16 %v734, %v732
    %v785 = vpack.c.b16 %v737, %v735
    %v786 = vpack.c.b16 %v738, %v736
    %v787 = vpack.c.b16 %v741, %v739
    %v788 = vpack.c.b16 %v742, %v740
    %v789 = vpack.c.b16 %v745, %v743
    %v790 = vpack.c.b16 %v746, %v744
    %v791 = vpack.c.b16 %v749, %v747
    %v792 = vpack.c.b16 %v750, %v748
    %v793 = vpack.c.b16 %v753, %v751
    %v794 = vpack.c.b16 %v754, %v752
    %v795 = vpack.c.b16 %v757, %v755
    %v796 = vpack.c.b16 %v758, %v756
    %v797 = vpack.c.b16 %v761, %v759
    %v798 = vpack.c.b16 %v762, %v760
    %v799 = vpack.c.b16 %v765, %v763
    %v800 = vpack.c.b16 %v766, %v764
    %v801 = vpack.c.b16 %v769, %v767
    %v802 = vpack.c.b16 %v770, %v768
    %835 = vmatprep.subr.bf16.mxu0 %v772
    %836 = vmatpush1.bf16.msra.mxu0 %v771
    %837 = vmatprep.subr.bf16.mxu0 %v774
    %838 = vmatpush1.bf16.msra.mxu0 %v773
    %839 = vmatprep.subr.bf16.mxu0 %v776
    %840 = vmatpush1.bf16.msra.mxu0 %v775
    %841 = vmatprep.subr.bf16.mxu0 %v778
    %842 = vmatpush1.bf16.msra.mxu0 %v777
    %843 = vmatprep.subr.bf16.mxu0 %v780
    %844 = vmatpush1.bf16.msra.mxu0 %v779
    %845 = vmatprep.subr.bf16.mxu0 %v782
    %846 = vmatpush1.bf16.msra.mxu0 %v781
    %847 = vmatprep.subr.bf16.mxu0 %v784
    %848 = vmatpush1.bf16.msra.mxu0 %v783
    %849 = vmatprep.subr.bf16.mxu0 %v786
    %850 = vmatpush1.bf16.msra.mxu0 %v785
    %851 = vmatprep.subr.bf16.mxu0 %v788
    %852 = vmatpush1.bf16.msra.mxu0 %v787
    %853 = vmatprep.subr.bf16.mxu0 %v790
    %854 = vmatpush1.bf16.msra.mxu0 %v789
    %855 = vmatprep.subr.bf16.mxu0 %v792
    %856 = vmatpush1.bf16.msra.mxu0 %v791
    %857 = vmatprep.subr.bf16.mxu0 %v794
    %858 = vmatpush1.bf16.msra.mxu0 %v793
    %859 = vmatprep.subr.bf16.mxu0 %v796
    %860 = vmatpush1.bf16.msra.mxu0 %v795
    %861 = vmatprep.subr.bf16.mxu0 %v798
    %862 = vmatpush1.bf16.msra.mxu0 %v797
    %863 = vmatprep.subr.bf16.mxu0 %v800
    %864 = vmatpush1.bf16.msra.mxu0 %v799
    %865 = vmatprep.subr.bf16.mxu0 %v802
    %866 = vmatpush1.bf16.msra.mxu0 %v801
    %867 = vmatprep.mubr.bf16.mxu0 %v641
    %868 = vmatmul.mubr.bf16.gmra.mrb[0].mxu0 %v640
    %v869 = vpop.f32.mrb[0].mxu0
    %v870 = vadd.f32 0.0, %v869
    %v871 = vpop.f32.mrb[0].mxu0
    %v872 = vadd.f32 0.0, %v871
    %v873 = vpop.f32.mrb[0].mxu0
    %v874 = vpop.f32.mrb[0].mxu0
    %875 = vdwg.mxu0
    %s876 = scalar_lea.vmem %s7, 2
    %v877 = vld [vmem:[%s876] sm:$0x3]
    %s878 = scalar_lea.vmem [#allocation12], 2
    %v879 = vld [vmem:[%s878] sm:$0x3]
    %v880 = vadd.f32 %v870, %v872
    %881 = vadd.xlane.f32.xlu0 %v880
    %v882 = vpop.xlane.xlu0 %881
    %v883 = vmul.f32 %v882, %v598
    %v884 = vsub.f32 %v870, %v883
    %v885 = vsub.f32 %v872, %v883
    %v886 = vmul.f32 %v884, %v884
    %v887 = vmul.f32 %v885, %v885
    %v888 = vadd.f32 %v886, %v887
    %889 = vadd.xlane.f32.xlu0 %v888
    %v890 = vpop.xlane.xlu0 %889
    %v891 = vmul.f32 %v890, %v598
    %v892 = vadd.f32 %v891, 1e-05
    %v893 = vrsqrt.pop %v892
    %v894 = vmul.f32 %v884, %v893
    %v895 = vmul.f32 %v885, %v893
    %v897 = vlaneseq
    %v898 = vshrl.u32 %v897, 7
    %v899 = vsub.s32 0, %v898
    %v900 = vrot.slane %v877, %v899
    %v901 = vlaneseq
    %v902 = vshrl.u32 %v901, 7
    %v903 = vsub.s32 1, %v902
    %v904 = vrot.slane %v877, %v903
    %v907 = vmul.f32 %v894, %v900
    %v908 = vmul.f32 %v895, %v904
    %v910 = vlaneseq
    %v911 = vshrl.u32 %v910, 7
    %v912 = vsub.s32 0, %v911
    %v913 = vrot.slane %v879, %v912
    %v914 = vlaneseq
    %v915 = vshrl.u32 %v914, 7
    %v916 = vsub.s32 1, %v915
    %v917 = vrot.slane %v879, %v916
    %v920 = vadd.f32 %v907, %v913
    %v921 = vadd.f32 %v908, %v917
    %v922 = vadd.f32 %v920, %v352
    %v923 = vadd.f32 %v921, %v354
    %v924 = vmax.f32 %v922, 0.0
    %v925 = vmax.f32 %v923, 0.0
    %v926 = vpack.c.bf16 %v924, %v924
    %v927 = vpack.c.bf16 %v925, %v925
    %s928 = scalar_lea.vmem [#allocation11], 512
    %v929 = vld [vmem:[%s928] sm:$0xff]
    %v930 = vld [vmem:[%s928 + $0x8] sm:$0xff]
    %v931 = vld [vmem:[%s928 + $0x10] sm:$0xff]
    %v932 = vld [vmem:[%s928 + $0x18] sm:$0xff]
    %v933 = vld [vmem:[%s928 + $0x20] sm:$0xff]
    %v934 = vld [vmem:[%s928 + $0x28] sm:$0xff]
    %v935 = vld [vmem:[%s928 + $0x30] sm:$0xff]
    %v936 = vld [vmem:[%s928 + $0x38] sm:$0xff]
    %v937 = vld [vmem:[%s928 + $0x40] sm:$0xff]
    %v938 = vld [vmem:[%s928 + $0x48] sm:$0xff]
    %v939 = vld [vmem:[%s928 + $0x50] sm:$0xff]
    %v940 = vld [vmem:[%s928 + $0x58] sm:$0xff]
    %v941 = vld [vmem:[%s928 + $0x60] sm:$0xff]
    %v942 = vld [vmem:[%s928 + $0x68] sm:$0xff]
    %v943 = vld [vmem:[%s928 + $0x70] sm:$0xff]
    %v944 = vld [vmem:[%s928 + $0x78] sm:$0xff]
    %v945 = vld [vmem:[%s928 + $0x80] sm:$0xff]
    %v946 = vld [vmem:[%s928 + $0x88] sm:$0xff]
    %v947 = vld [vmem:[%s928 + $0x90] sm:$0xff]
    %v948 = vld [vmem:[%s928 + $0x98] sm:$0xff]
    %v949 = vld [vmem:[%s928 + $0xa0] sm:$0xff]
    %v950 = vld [vmem:[%s928 + $0xa8] sm:$0xff]
    %v951 = vld [vmem:[%s928 + $0xb0] sm:$0xff]
    %v952 = vld [vmem:[%s928 + $0xb8] sm:$0xff]
    %v953 = vld [vmem:[%s928 + $0xc0] sm:$0xff]
    %v954 = vld [vmem:[%s928 + $0xc8] sm:$0xff]
    %v955 = vld [vmem:[%s928 + $0xd0] sm:$0xff]
    %v956 = vld [vmem:[%s928 + $0xd8] sm:$0xff]
    %v957 = vld [vmem:[%s928 + $0xe0] sm:$0xff]
    %v958 = vld [vmem:[%s928 + $0xe8] sm:$0xff]
    %v959 = vld [vmem:[%s928 + $0xf0] sm:$0xff]
    %v960 = vld [vmem:[%s928 + $0xf8] sm:$0xff]
    %v993 = vunpack.c.l.b16 %v929
    %v994 = vunpack.c.h.b16 %v929
    %v995 = vunpack.c.l.b16 %v930
    %v996 = vunpack.c.h.b16 %v930
    %v997 = vunpack.c.l.b16 %v931
    %v998 = vunpack.c.h.b16 %v931
    %v999 = vunpack.c.l.b16 %v932
    %v1000 = vunpack.c.h.b16 %v932
    %v1001 = vunpack.c.l.b16 %v933
    %v1002 = vunpack.c.h.b16 %v933
    %v1003 = vunpack.c.l.b16 %v934
    %v1004 = vunpack.c.h.b16 %v934
    %v1005 = vunpack.c.l.b16 %v935
    %v1006 = vunpack.c.h.b16 %v935
    %v1007 = vunpack.c.l.b16 %v936
    %v1008 = vunpack.c.h.b16 %v936
    %v1009 = vunpack.c.l.b16 %v937
    %v1010 = vunpack.c.h.b16 %v937
    %v1011 = vunpack.c.l.b16 %v938
    %v1012 = vunpack.c.h.b16 %v938
    %v1013 = vunpack.c.l.b16 %v939
    %v1014 = vunpack.c.h.b16 %v939
    %v1015 = vunpack.c.l.b16 %v940
    %v1016 = vunpack.c.h.b16 %v940
    %v1017 = vunpack.c.l.b16 %v941
    %v1018 = vunpack.c.h.b16 %v941
    %v1019 = vunpack.c.l.b16 %v942
    %v1020 = vunpack.c.h.b16 %v942
    %v1021 = vunpack.c.l.b16 %v943
    %v1022 = vunpack.c.h.b16 %v943
    %v1023 = vunpack.c.l.b16 %v944
    %v1024 = vunpack.c.h.b16 %v944
    %v1025 = vunpack.c.l.b16 %v945
    %v1026 = vunpack.c.h.b16 %v945
    %v1027 = vunpack.c.l.b16 %v946
    %v1028 = vunpack.c.h.b16 %v946
    %v1029 = vunpack.c.l.b16 %v947
    %v1030 = vunpack.c.h.b16 %v947
    %v1031 = vunpack.c.l.b16 %v948
    %v1032 = vunpack.c.h.b16 %v948
    %v1033 = vunpack.c.l.b16 %v949
    %v1034 = vunpack.c.h.b16 %v949
    %v1035 = vunpack.c.l.b16 %v950
    %v1036 = vunpack.c.h.b16 %v950
    %v1037 = vunpack.c.l.b16 %v951
    %v1038 = vunpack.c.h.b16 %v951
    %v1039 = vunpack.c.l.b16 %v952
    %v1040 = vunpack.c.h.b16 %v952
    %v1041 = vunpack.c.l.b16 %v953
    %v1042 = vunpack.c.h.b16 %v953
    %v1043 = vunpack.c.l.b16 %v954
    %v1044 = vunpack.c.h.b16 %v954
    %v1045 = vunpack.c.l.b16 %v955
    %v1046 = vunpack.c.h.b16 %v955
    %v1047 = vunpack.c.l.b16 %v956
    %v1048 = vunpack.c.h.b16 %v956
    %v1049 = vunpack.c.l.b16 %v957
    %v1050 = vunpack.c.h.b16 %v957
    %v1051 = vunpack.c.l.b16 %v958
    %v1052 = vunpack.c.h.b16 %v958
    %v1053 = vunpack.c.l.b16 %v959
    %v1054 = vunpack.c.h.b16 %v959
    %v1055 = vunpack.c.l.b16 %v960
    %v1056 = vunpack.c.h.b16 %v960
    %v1057 = vpack.c.b16 %v995, %v993
    %v1058 = vpack.c.b16 %v996, %v994
    %v1059 = vpack.c.b16 %v999, %v997
    %v1060 = vpack.c.b16 %v1000, %v998
    %v1061 = vpack.c.b16 %v1003, %v1001
    %v1062 = vpack.c.b16 %v1004, %v1002
    %v1063 = vpack.c.b16 %v1007, %v1005
    %v1064 = vpack.c.b16 %v1008, %v1006
    %v1065 = vpack.c.b16 %v1011, %v1009
    %v1066 = vpack.c.b16 %v1012, %v1010
    %v1067 = vpack.c.b16 %v1015, %v1013
    %v1068 = vpack.c.b16 %v1016, %v1014
    %v1069 = vpack.c.b16 %v1019, %v1017
    %v1070 = vpack.c.b16 %v1020, %v1018
    %v1071 = vpack.c.b16 %v1023, %v1021
    %v1072 = vpack.c.b16 %v1024, %v1022
    %v1073 = vpack.c.b16 %v1027, %v1025
    %v1074 = vpack.c.b16 %v1028, %v1026
    %v1075 = vpack.c.b16 %v1031, %v1029
    %v1076 = vpack.c.b16 %v1032, %v1030
    %v1077 = vpack.c.b16 %v1035, %v1033
    %v1078 = vpack.c.b16 %v1036, %v1034
    %v1079 = vpack.c.b16 %v1039, %v1037
    %v1080 = vpack.c.b16 %v1040, %v1038
    %v1081 = vpack.c.b16 %v1043, %v1041
    %v1082 = vpack.c.b16 %v1044, %v1042
    %v1083 = vpack.c.b16 %v1047, %v1045
    %v1084 = vpack.c.b16 %v1048, %v1046
    %v1085 = vpack.c.b16 %v1051, %v1049
    %v1086 = vpack.c.b16 %v1052, %v1050
    %v1087 = vpack.c.b16 %v1055, %v1053
    %v1088 = vpack.c.b16 %v1056, %v1054
    %1121 = vmatprep.subr.bf16.mxu0 %v1058
    %1122 = vmatpush1.bf16.msra.mxu0 %v1057
    %1123 = vmatprep.subr.bf16.mxu0 %v1060
    %1124 = vmatpush1.bf16.msra.mxu0 %v1059
    %1125 = vmatprep.subr.bf16.mxu0 %v1062
    %1126 = vmatpush1.bf16.msra.mxu0 %v1061
    %1127 = vmatprep.subr.bf16.mxu0 %v1064
    %1128 = vmatpush1.bf16.msra.mxu0 %v1063
    %1129 = vmatprep.subr.bf16.mxu0 %v1066
    %1130 = vmatpush1.bf16.msra.mxu0 %v1065
    %1131 = vmatprep.subr.bf16.mxu0 %v1068
    %1132 = vmatpush1.bf16.msra.mxu0 %v1067
    %1133 = vmatprep.subr.bf16.mxu0 %v1070
    %1134 = vmatpush1.bf16.msra.mxu0 %v1069
    %1135 = vmatprep.subr.bf16.mxu0 %v1072
    %1136 = vmatpush1.bf16.msra.mxu0 %v1071
    %1137 = vmatprep.subr.bf16.mxu0 %v1074
    %1138 = vmatpush1.bf16.msra.mxu0 %v1073
    %1139 = vmatprep.subr.bf16.mxu0 %v1076
    %1140 = vmatpush1.bf16.msra.mxu0 %v1075
    %1141 = vmatprep.subr.bf16.mxu0 %v1078
    %1142 = vmatpush1.bf16.msra.mxu0 %v1077
    %1143 = vmatprep.subr.bf16.mxu0 %v1080
    %1144 = vmatpush1.bf16.msra.mxu0 %v1079
    %1145 = vmatprep.subr.bf16.mxu0 %v1082
    %1146 = vmatpush1.bf16.msra.mxu0 %v1081
    %1147 = vmatprep.subr.bf16.mxu0 %v1084
    %1148 = vmatpush1.bf16.msra.mxu0 %v1083
    %1149 = vmatprep.subr.bf16.mxu0 %v1086
    %1150 = vmatpush1.bf16.msra.mxu0 %v1085
    %1151 = vmatprep.subr.bf16.mxu0 %v1088
    %1152 = vmatpush1.bf16.msra.mxu0 %v1087
    %1153 = vmatprep.mubr.bf16.mxu0 %v927
    %1154 = vmatmul.mubr.bf16.gmra.mrb[0].mxu0 %v926
    %v1155 = vpop.f32.mrb[0].mxu0
    %v1156 = vadd.f32 0.0, %v1155
    %v1157 = vpop.f32.mrb[0].mxu0
    %v1158 = vadd.f32 0.0, %v1157
    %v1159 = vpop.f32.mrb[0].mxu0
    %v1160 = vpop.f32.mrb[0].mxu0
    %1161 = vdwg.mxu0
    %s1162 = scalar_lea.vmem %s7, 4
    %v1163 = vld [vmem:[%s1162] sm:$0x3]
    %s1164 = scalar_lea.vmem [#allocation12], 4
    %v1165 = vld [vmem:[%s1164] sm:$0x3]
    %v1166 = vadd.f32 %v1156, %v1158
    %1167 = vadd.xlane.f32.xlu0 %v1166
    %v1168 = vpop.xlane.xlu0 %1167
    %v1169 = vmul.f32 %v1168, %v598
    %v1170 = vsub.f32 %v1156, %v1169
    %v1171 = vsub.f32 %v1158, %v1169
    %v1172 = vmul.f32 %v1170, %v1170
    %v1173 = vmul.f32 %v1171, %v1171
    %v1174 = vadd.f32 %v1172, %v1173
    %1175 = vadd.xlane.f32.xlu0 %v1174
    %v1176 = vpop.xlane.xlu0 %1175
    %v1177 = vmul.f32 %v1176, %v598
    %v1178 = vadd.f32 %v1177, 1e-05
    %v1179 = vrsqrt.pop %v1178
    %v1180 = vmul.f32 %v1170, %v1179
    %v1181 = vmul.f32 %v1171, %v1179
    %v1183 = vlaneseq
    %v1184 = vshrl.u32 %v1183, 7
    %v1185 = vsub.s32 0, %v1184
    %v1186 = vrot.slane %v1163, %v1185
    %v1187 = vlaneseq
    %v1188 = vshrl.u32 %v1187, 7
    %v1189 = vsub.s32 1, %v1188
    %v1190 = vrot.slane %v1163, %v1189
    %v1193 = vmul.f32 %v1180, %v1186
    %v1194 = vmul.f32 %v1181, %v1190
    %v1196 = vlaneseq
    %v1197 = vshrl.u32 %v1196, 7
    %v1198 = vsub.s32 0, %v1197
    %v1199 = vrot.slane %v1165, %v1198
    %v1200 = vlaneseq
    %v1201 = vshrl.u32 %v1200, 7
    %v1202 = vsub.s32 1, %v1201
    %v1203 = vrot.slane %v1165, %v1202
    %v1206 = vadd.f32 %v1193, %v1199
    %v1207 = vadd.f32 %v1194, %v1203
    %v1208 = vmax.f32 %v1206, 0.0
    %v1209 = vmax.f32 %v1207, 0.0
    %v1210 = vpack.c.bf16 %v1208, %v1208
    %v1211 = vpack.c.bf16 %v1209, %v1209
    %s1212 = scalar_lea.vmem [#allocation11], 768
    %v1213 = vld [vmem:[%s1212] sm:$0xff]
    %v1214 = vld [vmem:[%s1212 + $0x8] sm:$0xff]
    %v1215 = vld [vmem:[%s1212 + $0x10] sm:$0xff]
    %v1216 = vld [vmem:[%s1212 + $0x18] sm:$0xff]
    %v1217 = vld [vmem:[%s1212 + $0x20] sm:$0xff]
    %v1218 = vld [vmem:[%s1212 + $0x28] sm:$0xff]
    %v1219 = vld [vmem:[%s1212 + $0x30] sm:$0xff]
    %v1220 = vld [vmem:[%s1212 + $0x38] sm:$0xff]
    %v1221 = vld [vmem:[%s1212 + $0x40] sm:$0xff]
    %v1222 = vld [vmem:[%s1212 + $0x48] sm:$0xff]
    %v1223 = vld [vmem:[%s1212 + $0x50] sm:$0xff]
    %v1224 = vld [vmem:[%s1212 + $0x58] sm:$0xff]
    %v1225 = vld [vmem:[%s1212 + $0x60] sm:$0xff]
    %v1226 = vld [vmem:[%s1212 + $0x68] sm:$0xff]
    %v1227 = vld [vmem:[%s1212 + $0x70] sm:$0xff]
    %v1228 = vld [vmem:[%s1212 + $0x78] sm:$0xff]
    %v1229 = vld [vmem:[%s1212 + $0x80] sm:$0xff]
    %v1230 = vld [vmem:[%s1212 + $0x88] sm:$0xff]
    %v1231 = vld [vmem:[%s1212 + $0x90] sm:$0xff]
    %v1232 = vld [vmem:[%s1212 + $0x98] sm:$0xff]
    %v1233 = vld [vmem:[%s1212 + $0xa0] sm:$0xff]
    %v1234 = vld [vmem:[%s1212 + $0xa8] sm:$0xff]
    %v1235 = vld [vmem:[%s1212 + $0xb0] sm:$0xff]
    %v1236 = vld [vmem:[%s1212 + $0xb8] sm:$0xff]
    %v1237 = vld [vmem:[%s1212 + $0xc0] sm:$0xff]
    %v1238 = vld [vmem:[%s1212 + $0xc8] sm:$0xff]
    %v1239 = vld [vmem:[%s1212 + $0xd0] sm:$0xff]
    %v1240 = vld [vmem:[%s1212 + $0xd8] sm:$0xff]
    %v1241 = vld [vmem:[%s1212 + $0xe0] sm:$0xff]
    %v1242 = vld [vmem:[%s1212 + $0xe8] sm:$0xff]
    %v1243 = vld [vmem:[%s1212 + $0xf0] sm:$0xff]
    %v1244 = vld [vmem:[%s1212 + $0xf8] sm:$0xff]
    %v1277 = vunpack.c.l.b16 %v1213
    %v1278 = vunpack.c.h.b16 %v1213
    %v1279 = vunpack.c.l.b16 %v1214
    %v1280 = vunpack.c.h.b16 %v1214
    %v1281 = vunpack.c.l.b16 %v1215
    %v1282 = vunpack.c.h.b16 %v1215
    %v1283 = vunpack.c.l.b16 %v1216
    %v1284 = vunpack.c.h.b16 %v1216
    %v1285 = vunpack.c.l.b16 %v1217
    %v1286 = vunpack.c.h.b16 %v1217
    %v1287 = vunpack.c.l.b16 %v1218
    %v1288 = vunpack.c.h.b16 %v1218
    %v1289 = vunpack.c.l.b16 %v1219
    %v1290 = vunpack.c.h.b16 %v1219
    %v1291 = vunpack.c.l.b16 %v1220
    %v1292 = vunpack.c.h.b16 %v1220
    %v1293 = vunpack.c.l.b16 %v1221
    %v1294 = vunpack.c.h.b16 %v1221
    %v1295 = vunpack.c.l.b16 %v1222
    %v1296 = vunpack.c.h.b16 %v1222
    %v1297 = vunpack.c.l.b16 %v1223
    %v1298 = vunpack.c.h.b16 %v1223
    %v1299 = vunpack.c.l.b16 %v1224
    %v1300 = vunpack.c.h.b16 %v1224
    %v1301 = vunpack.c.l.b16 %v1225
    %v1302 = vunpack.c.h.b16 %v1225
    %v1303 = vunpack.c.l.b16 %v1226
    %v1304 = vunpack.c.h.b16 %v1226
    %v1305 = vunpack.c.l.b16 %v1227
    %v1306 = vunpack.c.h.b16 %v1227
    %v1307 = vunpack.c.l.b16 %v1228
    %v1308 = vunpack.c.h.b16 %v1228
    %v1309 = vunpack.c.l.b16 %v1229
    %v1310 = vunpack.c.h.b16 %v1229
    %v1311 = vunpack.c.l.b16 %v1230
    %v1312 = vunpack.c.h.b16 %v1230
    %v1313 = vunpack.c.l.b16 %v1231
    %v1314 = vunpack.c.h.b16 %v1231
    %v1315 = vunpack.c.l.b16 %v1232
    %v1316 = vunpack.c.h.b16 %v1232
    %v1317 = vunpack.c.l.b16 %v1233
    %v1318 = vunpack.c.h.b16 %v1233
    %v1319 = vunpack.c.l.b16 %v1234
    %v1320 = vunpack.c.h.b16 %v1234
    %v1321 = vunpack.c.l.b16 %v1235
    %v1322 = vunpack.c.h.b16 %v1235
    %v1323 = vunpack.c.l.b16 %v1236
    %v1324 = vunpack.c.h.b16 %v1236
    %v1325 = vunpack.c.l.b16 %v1237
    %v1326 = vunpack.c.h.b16 %v1237
    %v1327 = vunpack.c.l.b16 %v1238
    %v1328 = vunpack.c.h.b16 %v1238
    %v1329 = vunpack.c.l.b16 %v1239
    %v1330 = vunpack.c.h.b16 %v1239
    %v1331 = vunpack.c.l.b16 %v1240
    %v1332 = vunpack.c.h.b16 %v1240
    %v1333 = vunpack.c.l.b16 %v1241
    %v1334 = vunpack.c.h.b16 %v1241
    %v1335 = vunpack.c.l.b16 %v1242
    %v1336 = vunpack.c.h.b16 %v1242
    %v1337 = vunpack.c.l.b16 %v1243
    %v1338 = vunpack.c.h.b16 %v1243
    %v1339 = vunpack.c.l.b16 %v1244
    %v1340 = vunpack.c.h.b16 %v1244
    %v1341 = vpack.c.b16 %v1279, %v1277
    %v1342 = vpack.c.b16 %v1280, %v1278
    %v1343 = vpack.c.b16 %v1283, %v1281
    %v1344 = vpack.c.b16 %v1284, %v1282
    %v1345 = vpack.c.b16 %v1287, %v1285
    %v1346 = vpack.c.b16 %v1288, %v1286
    %v1347 = vpack.c.b16 %v1291, %v1289
    %v1348 = vpack.c.b16 %v1292, %v1290
    %v1349 = vpack.c.b16 %v1295, %v1293
    %v1350 = vpack.c.b16 %v1296, %v1294
    %v1351 = vpack.c.b16 %v1299, %v1297
    %v1352 = vpack.c.b16 %v1300, %v1298
    %v1353 = vpack.c.b16 %v1303, %v1301
    %v1354 = vpack.c.b16 %v1304, %v1302
    %v1355 = vpack.c.b16 %v1307, %v1305
    %v1356 = vpack.c.b16 %v1308, %v1306
    %v1357 = vpack.c.b16 %v1311, %v1309
    %v1358 = vpack.c.b16 %v1312, %v1310
    %v1359 = vpack.c.b16 %v1315, %v1313
    %v1360 = vpack.c.b16 %v1316, %v1314
    %v1361 = vpack.c.b16 %v1319, %v1317
    %v1362 = vpack.c.b16 %v1320, %v1318
    %v1363 = vpack.c.b16 %v1323, %v1321
    %v1364 = vpack.c.b16 %v1324, %v1322
    %v1365 = vpack.c.b16 %v1327, %v1325
    %v1366 = vpack.c.b16 %v1328, %v1326
    %v1367 = vpack.c.b16 %v1331, %v1329
    %v1368 = vpack.c.b16 %v1332, %v1330
    %v1369 = vpack.c.b16 %v1335, %v1333
    %v1370 = vpack.c.b16 %v1336, %v1334
    %v1371 = vpack.c.b16 %v1339, %v1337
    %v1372 = vpack.c.b16 %v1340, %v1338
    %1405 = vmatprep.subr.bf16.mxu0 %v1342
    %1406 = vmatpush1.bf16.msra.mxu0 %v1341
    %1407 = vmatprep.subr.bf16.mxu0 %v1344
    %1408 = vmatpush1.bf16.msra.mxu0 %v1343
    %1409 = vmatprep.subr.bf16.mxu0 %v1346
    %1410 = vmatpush1.bf16.msra.mxu0 %v1345
    %1411 = vmatprep.subr.bf16.mxu0 %v1348
    %1412 = vmatpush1.bf16.msra.mxu0 %v1347
    %1413 = vmatprep.subr.bf16.mxu0 %v1350
    %1414 = vmatpush1.bf16.msra.mxu0 %v1349
    %1415 = vmatprep.subr.bf16.mxu0 %v1352
    %1416 = vmatpush1.bf16.msra.mxu0 %v1351
    %1417 = vmatprep.subr.bf16.mxu0 %v1354
    %1418 = vmatpush1.bf16.msra.mxu0 %v1353
    %1419 = vmatprep.subr.bf16.mxu0 %v1356
    %1420 = vmatpush1.bf16.msra.mxu0 %v1355
    %1421 = vmatprep.subr.bf16.mxu0 %v1358
    %1422 = vmatpush1.bf16.msra.mxu0 %v1357
    %1423 = vmatprep.subr.bf16.mxu0 %v1360
    %1424 = vmatpush1.bf16.msra.mxu0 %v1359
    %1425 = vmatprep.subr.bf16.mxu0 %v1362
    %1426 = vmatpush1.bf16.msra.mxu0 %v1361
    %1427 = vmatprep.subr.bf16.mxu0 %v1364
    %1428 = vmatpush1.bf16.msra.mxu0 %v1363
    %1429 = vmatprep.subr.bf16.mxu0 %v1366
    %1430 = vmatpush1.bf16.msra.mxu0 %v1365
    %1431 = vmatprep.subr.bf16.mxu0 %v1368
    %1432 = vmatpush1.bf16.msra.mxu0 %v1367
    %1433 = vmatprep.subr.bf16.mxu0 %v1370
    %1434 = vmatpush1.bf16.msra.mxu0 %v1369
    %1435 = vmatprep.subr.bf16.mxu0 %v1372
    %1436 = vmatpush1.bf16.msra.mxu0 %v1371
    %1437 = vmatprep.mubr.bf16.mxu0 %v1211
    %1438 = vmatmul.mubr.bf16.gmra.mrb[0].mxu0 %v1210
    %v1439 = vpop.f32.mrb[0].mxu0
    %v1440 = vadd.f32 0.0, %v1439
    %v1441 = vpop.f32.mrb[0].mxu0
    %v1442 = vadd.f32 0.0, %v1441
    %v1443 = vpop.f32.mrb[0].mxu0
    %v1444 = vpop.f32.mrb[0].mxu0
    %1445 = vdwg.mxu0
    %s1446 = scalar_lea.vmem %s7, 6
    %v1447 = vld [vmem:[%s1446] sm:$0x3]
    %s1448 = scalar_lea.vmem [#allocation12], 6
    %v1449 = vld [vmem:[%s1448] sm:$0x3]
    %v1450 = vadd.f32 %v1440, %v1442
    %1451 = vadd.xlane.f32.xlu0 %v1450
    %v1452 = vpop.xlane.xlu0 %1451
    %v1453 = vmul.f32 %v1452, %v598
    %v1454 = vsub.f32 %v1440, %v1453
    %v1455 = vsub.f32 %v1442, %v1453
    %v1456 = vmul.f32 %v1454, %v1454
    %v1457 = vmul.f32 %v1455, %v1455
    %v1458 = vadd.f32 %v1456, %v1457
    %1459 = vadd.xlane.f32.xlu0 %v1458
    %v1460 = vpop.xlane.xlu0 %1459
    %v1461 = vmul.f32 %v1460, %v598
    %v1462 = vadd.f32 %v1461, 1e-05
    %v1463 = vrsqrt.pop %v1462
    %v1464 = vmul.f32 %v1454, %v1463
    %v1465 = vmul.f32 %v1455, %v1463
    %v1467 = vlaneseq
    %v1468 = vshrl.u32 %v1467, 7
    %v1469 = vsub.s32 0, %v1468
    %v1470 = vrot.slane %v1447, %v1469
    %v1471 = vlaneseq
    %v1472 = vshrl.u32 %v1471, 7
    %v1473 = vsub.s32 1, %v1472
    %v1474 = vrot.slane %v1447, %v1473
    %v1477 = vmul.f32 %v1464, %v1470
    %v1478 = vmul.f32 %v1465, %v1474
    %v1480 = vlaneseq
    %v1481 = vshrl.u32 %v1480, 7
    %v1482 = vsub.s32 0, %v1481
    %v1483 = vrot.slane %v1449, %v1482
    %v1484 = vlaneseq
    %v1485 = vshrl.u32 %v1484, 7
    %v1486 = vsub.s32 1, %v1485
    %v1487 = vrot.slane %v1449, %v1486
    %v1490 = vadd.f32 %v1477, %v1483
    %v1491 = vadd.f32 %v1478, %v1487
    %v1492 = vadd.f32 %v1490, %v924
    %v1493 = vadd.f32 %v1491, %v925
    %v1494 = vmax.f32 %v1492, 0.0
    %v1495 = vmax.f32 %v1493, 0.0
    %v1496 = vmax.f32 %v1494, 0.0
    %v1497 = vmax.f32 %v1495, 0.0
    %v1498 = vld [vmem:[%s9] sm:$0x3]
    %v1500 = vlaneseq
    %v1501 = vshrl.u32 %v1500, 7
    %v1502 = vsub.s32 0, %v1501
    %v1503 = vrot.slane %v1498, %v1502
    %v1504 = vlaneseq
    %v1505 = vshrl.u32 %v1504, 7
    %v1506 = vsub.s32 1, %v1505
    %v1507 = vrot.slane %v1498, %v1506
    %v1510 = vmul.f32 %v1496, %v1503
    %v1511 = vmul.f32 %v1497, %v1507
    %v1512 = vadd.f32 %v1510, %v1511
    %1513 = vadd.xlane.f32.xlu0 %v1512
    %v1514 = vpop.xlane.xlu0 %1513
    %v1515 = vld [vmem:[#allocation3] sm:$0x1]
    %v1517 = vlaneseq
    %v1518 = vshrl.u32 %v1517, 7
    %v1519 = vsub.s32 0, %v1518
    %v1520 = vrot.slane %v1515, %v1519
    %v1522 = vadd.f32 %v1514, %v1520
    %vm1523 = vcmask 7168
    %1524 = vst.msk [vmem:[%s11] sm:$0xff] %vm1523, %v1522
    // Predicated region
    $region70: #{baseline_forward.1} parent=1 // pred_check
      _
    $region71: #{baseline_forward.1} parent=1 // pred_check_branch
      %1526 = sbr.rel (0) target = $region73
    $region72: #{baseline_forward.1} parent=1 // pred_region
      _
    $region73: #{baseline_forward.1} parent=1 // pred_fallthru
      _
    // Predicated region
    $region74: #{baseline_forward.1} parent=1 // pred_check
      _
    $region75: #{baseline_forward.1} parent=1 // pred_check_branch
      %1528 = sbr.rel (0) target = $region77
    $region76: #{baseline_forward.1} parent=1 // pred_region
      _
    $region77: #{baseline_forward.1} parent=1 // pred_fallthru
      _
    %1529 = vsyncpa [#allocation5], 1
    %1530 = vsyncpa [#allocation7], 1
    %1531 = vsyncpa [#allocation10], 1
    %1532 = vsyncpa [#allocation13], 1

</llo_original>
